<compile_context>
chip_gen: v6e
topology: v6e:2x2x1
jax: 0.10.0
libtpu: 0.0.40
codegen_flags: <defaults>
</compile_context>

<pallas_src>
import functools

import jax
import jax.numpy as jnp
from jax.experimental import pallas as pl
from jax.experimental.pallas import tpu as pltpu


def _round_up(n, m):
    return (n + m - 1) // m * m


def _hta_kernel(x_ref, state_ref, wcat_ref, bl_ref, wo_ref, decay_ref,
                out_ref, ns_ref, *, hidden, depth, hp, compute_dtype):
    # Per grid step (one batch b, one time tile t):
    #   x_ref     : [1, tt, H]   activations, caller dtype
    #   state_ref : [1, D, H]    original state, caller dtype
    #   wcat_ref  : [H, 3*Hp+Dp] fused [Wv|Wk|Wr|Wl], compute dtype,
    #                            sections start at 0 / Hp / 2Hp / 3Hp
    #   bl_ref    : [1, D]       level-selector bias (f32)
    #   wo_ref    : [H, H]       output projection, compute dtype
    #   decay_ref : [D, H]       exp(-exp(time_decay_multi)) (f32)
    #   out_ref   : [1, tt, H]   output rows, caller dtype
    #   ns_ref    : [1, D, H]    new state; resident across the time axis,
    #                            written on the last time tile only
    t_idx = pl.program_id(1)
    n_t = pl.num_programs(1)
    H = hidden
    tt = x_ref.shape[1]

    x = x_ref[0].astype(compute_dtype)                          # [tt, H]

    # One fused, lane-aligned MXU matmul for all four projections (f32 acc).
    proj = jnp.dot(x, wcat_ref[...], preferred_element_type=jnp.float32)

    v = proj[:, 0:H]                                            # [tt, H]
    k = proj[:, hp:hp + H]                                      # [tt, H]
    r_lin = proj[:, 2 * hp:2 * hp + H]                          # [tt, H]
    logits = proj[:, 3 * hp:3 * hp + depth] + bl_ref[...]       # [tt, D]

    # Receptance gate (exact f32 sigmoid).
    r = 1.0 / (1.0 + jnp.exp(-r_lin))

    # Level-selector softmax over the small hierarchy-depth axis.
    m = jnp.max(logits, axis=-1, keepdims=True)
    e = jnp.exp(logits - m)
    lw = e / jnp.sum(e, axis=-1, keepdims=True)                 # [tt, D]

    # Decayed ORIGINAL state (decay hoisted to the wrapper; tiny VPU mul).
    decayed = state_ref[0].astype(jnp.float32) * decay_ref[...]  # [D, H]

    kv = k * v                                                  # [tt, H]

    # weighted[t] = sum_d lw[t,d] * (decayed[d] + kv[t])
    #            = kv[t] + sum_d lw[t,d] * decayed[d]   (softmax rows sum to 1)
    # D ~ 4: unrolled VPU accumulate instead of a K=4 MXU matmul / 3-D reshape.
    weighted = kv
    for d in range(depth):
        weighted = weighted + lw[:, d:d + 1] * decayed[d:d + 1, :]

    ot = (r * weighted).astype(compute_dtype)
    out_ref[0] = jnp.dot(ot, wo_ref[...],
                         preferred_element_type=jnp.float32).astype(out_ref.dtype)

    # new_state = decayed_state + kv at the last timestep (reference re-reads
    # the ORIGINAL state each step).  Write once, on the last time tile.
    @pl.when(t_idx == n_t - 1)
    def _():
        ns_ref[0] = (decayed + kv[tt - 1:tt, :]).astype(ns_ref.dtype)


def _choose_time_tile(seq_len, max_rows=256):
    """Largest time tile <= max_rows that divides T with tt % 8 == 0 (or T)."""
    if seq_len <= max_rows:
        return seq_len
    best = None
    for c in range(8, max_rows + 1, 8):
        if seq_len % c == 0:
            best = c
    return best if best is not None else seq_len


def _vmem_capacity_bytes():
    try:
        return int(getattr(pltpu.get_tpu_info(), "vmem_capacity_bytes", 64 << 20))
    except Exception:
        return 64 << 20


def hierarchical_time_attention(x, state, params, compute_dtype=jnp.bfloat16):
    """x: [B, T, H]; state: [B, D, H]. Returns (output [B,T,H], new_state [B,D,H]).

    compute_dtype=jnp.bfloat16 uses the native-bf16 MXU path (f32 accumulation);
    pass jnp.float32 for bit-faithful f32 semantics.
    """
    B, T, H = x.shape
    D = params["time_decay_multi"].shape[0]

    Hp = _round_up(H, 128)          # lane-aligned section stride inside wcat
    Dp = _round_up(D, 128)
    Ncat = 3 * Hp + Dp
    f32 = jnp.float32
    cdt = compute_dtype

    # PyTorch Linear computes x @ W.T; pass transposed weights so kernel does x @ W.
    wcat = jnp.zeros((H, Ncat), f32)
    wcat = wcat.at[:, 0:H].set(params["time_value_w"].T.astype(f32))
    wcat = wcat.at[:, Hp:Hp + H].set(params["time_key_w"].T.astype(f32))
    wcat = wcat.at[:, 2 * Hp:2 * Hp + H].set(params["time_receptance_w"].T.astype(f32))
    wcat = wcat.at[:, 3 * Hp:3 * Hp + D].set(params["level_selector_w"].T.astype(f32))
    wcat = wcat.astype(cdt)
    wo_p = params["time_output_w"].T.astype(cdt)
    bl = params["level_selector_b"].astype(f32).reshape(1, D)
    # Grid-invariant hierarchical decay, hoisted out of the kernel.
    decay = jnp.exp(-jnp.exp(params["time_decay_multi"].astype(f32)))   # [D, H]

    tt = _choose_time_tile(T)
    n_t = T // tt
    grid = (B, n_t)

    bytes_io = jnp.dtype(x.dtype).itemsize
    bytes_c = jnp.dtype(cdt).itemsize

    def build(single_buffer_weights):
        wbuf = 1 if single_buffer_weights else 2
        # VMEM high-water estimate: pipeline buffers + residents + intermediates.
        est = (
            2 * tt * H * bytes_io                    # x tile (double-buffered)
            + 2 * D * H * bytes_io                   # state tile
            + 2 * tt * H * bytes_io                  # out tile
            + 2 * D * H * bytes_io                   # new_state tile
            + wbuf * (H * Ncat + H * H) * bytes_c    # wcat + wo residents
            + wbuf * (D * H + D) * 4                 # decay + bias residents
            + tt * Ncat * 4                          # proj intermediate (f32)
            + 8 * tt * Hp * 4                        # v,k,r,kv,weighted,ot,... live f32
            + 2 * tt * 128 * 4                       # logits / level weights
            + 2 * D * Hp * 4                         # decayed (+ broadcast temp)
        )
        cap = int(_vmem_capacity_bytes() * 0.85)     # ~54 MiB v7x, ~108 MiB v5e/v6e
        vmem_limit = int(min(cap, max(32 << 20, 2 * est)))
        # TODO(synk): add K/N tiling of wcat/wo (reduction grid axis with a
        # pl.when-guarded accumulator) for very large H where the resident
        # weights alone approach the VMEM budget (earliest on v7x's 64 MiB).

        def resident(shape):
            idx = lambda b, t: (0,) * len(shape)
            if single_buffer_weights:
                return pl.BlockSpec(shape, idx, pipeline_mode=pl.Buffered(1))
            return pl.BlockSpec(shape, idx)

        kernel = functools.partial(_hta_kernel, hidden=H, depth=D, hp=Hp,
                                   compute_dtype=cdt)
        return pl.pallas_call(
            kernel,
            out_shape=(
                jax.ShapeDtypeStruct((B, T, H), x.dtype),
                jax.ShapeDtypeStruct((B, D, H), x.dtype),
            ),
            grid=grid,
            in_specs=[
                pl.BlockSpec((1, tt, H), lambda b, t: (b, t, 0)),    # x
                pl.BlockSpec((1, D, H), lambda b, t: (b, 0, 0)),     # state
                resident((H, Ncat)),                                 # fused W
                resident((1, D)),                                    # level bias
                resident((H, H)),                                    # Wo
                resident((D, H)),                                    # decay
            ],
            out_specs=(
                pl.BlockSpec((1, tt, H), lambda b, t: (b, t, 0)),    # output
                pl.BlockSpec((1, D, H), lambda b, t: (b, 0, 0)),     # new_state
            ),
            compiler_params=pltpu.CompilerParams(
                dimension_semantics=("parallel", "arbitrary"),
                vmem_limit_bytes=vmem_limit),
        )

    try:
        out, new_state = build(True)(x, state, wcat, bl, wo_p, decay)
    except Exception:
        # Fallback if single-buffered (Buffered(1)) resident blocks are not
        # supported by the installed Pallas version.
        out, new_state = build(False)(x, state, wcat, bl, wo_p, decay)
    return out, new_state


def _init_params(key, hidden_size, max_depth):
    """Deterministic parameter init mirroring the module's __init__ shapes."""
    ks = jax.random.split(key, 6)
    bound = 1.0 / jnp.sqrt(hidden_size)

    def lin(k, out_f, in_f):
        return jax.random.uniform(k, (out_f, in_f), jnp.float32, -bound, bound)

    # time_decay_multi[d] = 0.9 ** (d + 1), as in the torch.no_grad() init.
    decay_base = 0.9 ** (jnp.arange(1, max_depth + 1, dtype=jnp.float32))
    tdm = jnp.broadcast_to(decay_base[:, None], (max_depth, hidden_size))

    return {
        "time_decay_multi": tdm,                                  # [D, H]
        "level_selector_w": lin(ks[0], max_depth, hidden_size),   # [D, H]
        "level_selector_b": jax.random.uniform(
            ks[1], (max_depth,), jnp.float32, -bound, bound),     # [D]
        "time_value_w": lin(ks[2], hidden_size, hidden_size),     # [H, H]
        "time_key_w": lin(ks[3], hidden_size, hidden_size),       # [H, H]
        "time_receptance_w": lin(ks[4], hidden_size, hidden_size),
        "time_output_w": lin(ks[5], hidden_size, hidden_size),
        # state_compress exists in __init__ but is unused in forward(); omitted.
    }


def _reference(x, state, p):
    """Pure-JAX reference with the PyTorch module's semantics."""
    v = x @ p["time_value_w"].T
    k = x @ p["time_key_w"].T
    r = jax.nn.sigmoid(x @ p["time_receptance_w"].T)
    lw = jax.nn.softmax(x @ p["level_selector_w"].T + p["level_selector_b"], axis=-1)
    decay = jnp.exp(-jnp.exp(p["time_decay_multi"]))            # [D, H]
    decayed = state * decay[None]                               # [B, D, H]
    kv = k * v                                                  # [B, T, H]
    weighted = (jnp.einsum("btd,bdh->bth", lw, decayed)
                + kv * lw.sum(-1, keepdims=True))
    out = (r * weighted) @ p["time_output_w"].T
    new_state = decayed + kv[:, -1:, :]
    return out, new_state


if __name__ == "__main__":
    B, T, H, D = 2, 8, 32, 4
    key = jax.random.PRNGKey(0)
    k_x, k_s, k_p = jax.random.split(key, 3)

    x = jax.random.normal(k_x, (B, T, H), jnp.float32)
    state = jax.random.normal(k_s, (B, D, H), jnp.float32) * 0.1
    params = _init_params(k_p, H, D)

    ref_out, ref_ns = _reference(x, state, params)

    # Exact f32 path (matches PyTorch f32 forward semantics).
    out32, ns32 = hierarchical_time_attention(x, state, params,
                                              compute_dtype=jnp.float32)
    out32 = jax.block_until_ready(out32)
    ns32 = jax.block_until_ready(ns32)
    assert out32.shape == (B, T, H) and ns32.shape == (B, D, H)
    assert jnp.allclose(out32, ref_out, rtol=2e-4, atol=2e-4)
    assert jnp.allclose(ns32, ref_ns, rtol=2e-4, atol=2e-4)

    # Default bf16-MXU path (native MXU dtype on v5e/v6e/v7x, f32 accumulation).
    out16, ns16 = hierarchical_time_attention(x, state, params)
    out16 = jax.block_until_ready(out16)
    ns16 = jax.block_until_ready(ns16)
    assert out16.shape == (B, T, H) and ns16.shape == (B, D, H)
    assert jnp.allclose(out16, ref_out, rtol=5e-2, atol=5e-2)
    assert jnp.allclose(ns16, ref_ns, rtol=5e-2, atol=5e-2)

    print("KERNEL_OK")
</pallas_src>

<mosaic_0001>
module attributes {stable_mosaic.version = 11 : i64} {
  func.func @_hta_kernel(%arg0: i32, %arg1: i32, %arg2: memref<1x8x32xf32, #tpu.memory_space<vmem>>, %arg3: memref<1x4x32xf32, #tpu.memory_space<vmem>>, %arg4: memref<32x512xf32, #tpu.memory_space<vmem>>, %arg5: memref<1x4xf32, #tpu.memory_space<vmem>>, %arg6: memref<32x32xf32, #tpu.memory_space<vmem>>, %arg7: memref<4x32xf32, #tpu.memory_space<vmem>>, %arg8: memref<1x8x32xf32, #tpu.memory_space<vmem>>, %arg9: memref<1x4x32xf32, #tpu.memory_space<vmem>>) attributes {dimension_semantics = [#tpu.dimension_semantics<parallel>, #tpu.dimension_semantics<arbitrary>], iteration_bounds = array<i64: 2, 1>, scalar_prefetch = 0 : i64, scratch_operands = 0 : i64, tpu.core_type = #tpu.core_type<tc>, window_params = [{transform_indices = @transform_0, window_bounds = array<i64: 1, 8, 32>}, {transform_indices = @transform_1, window_bounds = array<i64: 1, 4, 32>}, {pipeline_mode = #tpu.pipeline_mode<synchronous>, transform_indices = @transform_2, window_bounds = array<i64: 32, 512>}, {pipeline_mode = #tpu.pipeline_mode<synchronous>, transform_indices = @transform_3, window_bounds = array<i64: 1, 4>}, {pipeline_mode = #tpu.pipeline_mode<synchronous>, transform_indices = @transform_4, window_bounds = array<i64: 32, 32>}, {pipeline_mode = #tpu.pipeline_mode<synchronous>, transform_indices = @transform_5, window_bounds = array<i64: 4, 32>}, {transform_indices = @transform_6, window_bounds = array<i64: 1, 8, 32>}, {transform_indices = @transform_7, window_bounds = array<i64: 1, 4, 32>}]} {
    %c0 = arith.constant 0 : index
    %c0_0 = arith.constant 0 : index
    %c0_1 = arith.constant 0 : index
    %0 = vector.load %arg2[%c0, %c0_0, %c0_1] : memref<1x8x32xf32, #tpu.memory_space<vmem>>, vector<1x8x32xf32>
    %1 = vector.shape_cast %0 : vector<1x8x32xf32> to vector<8x32xf32>
    %c0_2 = arith.constant 0 : index
    %c0_3 = arith.constant 0 : index
    %2 = vector.load %arg4[%c0_2, %c0_3] : memref<32x512xf32, #tpu.memory_space<vmem>>, vector<32x512xf32>
    %cst = arith.constant dense<0.000000e+00> : vector<8x512xf32>
    %3 = tpu.matmul %1, %2, %cst {dimension_numbers = #tpu.dot_dimension_numbers<[1], [0], [0], [1], [0, 0, 1, 1], [], []>} : vector<8x32xf32>, vector<32x512xf32>, vector<8x512xf32> -> vector<8x512xf32>
    %4 = vector.extract_strided_slice %3 {offsets = [0, 0], sizes = [8, 32], strides = [1, 1]} : vector<8x512xf32> to vector<8x32xf32>
    %5 = vector.extract_strided_slice %3 {offsets = [0, 128], sizes = [8, 32], strides = [1, 1]} : vector<8x512xf32> to vector<8x32xf32>
    %6 = vector.extract_strided_slice %3 {offsets = [0, 256], sizes = [8, 32], strides = [1, 1]} : vector<8x512xf32> to vector<8x32xf32>
    %7 = vector.extract_strided_slice %3 {offsets = [0, 384], sizes = [8, 4], strides = [1, 1]} : vector<8x512xf32> to vector<8x4xf32>
    %c0_4 = arith.constant 0 : index
    %c0_5 = arith.constant 0 : index
    %8 = vector.load %arg5[%c0_4, %c0_5] : memref<1x4xf32, #tpu.memory_space<vmem>>, vector<1x4xf32>
    %9 = vector.broadcast %8 : vector<1x4xf32> to vector<8x4xf32>
    %10 = arith.addf %7, %9 : vector<8x4xf32>
    %cst_6 = arith.constant 0.000000e+00 : f32
    %11 = vector.broadcast %cst_6 : f32 to vector<8x32xf32>
    %12 = arith.subf %11, %6 : vector<8x32xf32>
    %13 = math.exp %12 : vector<8x32xf32>
    %cst_7 = arith.constant 1.000000e+00 : f32
    %14 = vector.broadcast %cst_7 : f32 to vector<8x32xf32>
    %15 = arith.addf %14, %13 : vector<8x32xf32>
    %cst_8 = arith.constant 1.000000e+00 : f32
    %16 = vector.broadcast %cst_8 : f32 to vector<8x32xf32>
    %17 = arith.divf %16, %15 : vector<8x32xf32>
    %cst_9 = arith.constant dense<0xFF800000> : vector<8xf32>
    %18 = vector.multi_reduction <maximumf>, %10, %cst_9 [1] : vector<8x4xf32> to vector<8xf32>
    %19 = vector.shape_cast %18 : vector<8xf32> to vector<8x1xf32>
    %20 = vector.broadcast %19 : vector<8x1xf32> to vector<8x4xf32>
    %21 = arith.subf %10, %20 : vector<8x4xf32>
    %22 = math.exp %21 : vector<8x4xf32>
    %cst_10 = arith.constant dense<0.000000e+00> : vector<8xf32>
    %23 = vector.multi_reduction <add>, %22, %cst_10 [1] : vector<8x4xf32> to vector<8xf32>
    %24 = vector.shape_cast %23 : vector<8xf32> to vector<8x1xf32>
    %25 = vector.broadcast %24 : vector<8x1xf32> to vector<8x4xf32>
    %26 = arith.divf %22, %25 : vector<8x4xf32>
    %c0_11 = arith.constant 0 : index
    %c0_12 = arith.constant 0 : index
    %c0_13 = arith.constant 0 : index
    %27 = vector.load %arg3[%c0_11, %c0_12, %c0_13] : memref<1x4x32xf32, #tpu.memory_space<vmem>>, vector<1x4x32xf32>
    %28 = vector.shape_cast %27 : vector<1x4x32xf32> to vector<4x32xf32>
    %c0_14 = arith.constant 0 : index
    %c0_15 = arith.constant 0 : index
    %29 = vector.load %arg7[%c0_14, %c0_15] : memref<4x32xf32, #tpu.memory_space<vmem>>, vector<4x32xf32>
    %30 = arith.mulf %28, %29 : vector<4x32xf32>
    %31 = arith.mulf %5, %4 : vector<8x32xf32>
    %32 = vector.extract_strided_slice %26 {offsets = [0, 0], sizes = [8, 1], strides = [1, 1]} : vector<8x4xf32> to vector<8x1xf32>
    %33 = vector.extract_strided_slice %30 {offsets = [0, 0], sizes = [1, 32], strides = [1, 1]} : vector<4x32xf32> to vector<1x32xf32>
    %34 = vector.broadcast %32 : vector<8x1xf32> to vector<8x32xf32>
    %35 = vector.broadcast %33 : vector<1x32xf32> to vector<8x32xf32>
    %36 = arith.mulf %34, %35 : vector<8x32xf32>
    %37 = arith.addf %31, %36 : vector<8x32xf32>
    %38 = vector.extract_strided_slice %26 {offsets = [0, 1], sizes = [8, 1], strides = [1, 1]} : vector<8x4xf32> to vector<8x1xf32>
    %39 = vector.extract_strided_slice %30 {offsets = [1, 0], sizes = [1, 32], strides = [1, 1]} : vector<4x32xf32> to vector<1x32xf32>
    %40 = vector.broadcast %38 : vector<8x1xf32> to vector<8x32xf32>
    %41 = vector.broadcast %39 : vector<1x32xf32> to vector<8x32xf32>
    %42 = arith.mulf %40, %41 : vector<8x32xf32>
    %43 = arith.addf %37, %42 : vector<8x32xf32>
    %44 = vector.extract_strided_slice %26 {offsets = [0, 2], sizes = [8, 1], strides = [1, 1]} : vector<8x4xf32> to vector<8x1xf32>
    %45 = vector.extract_strided_slice %30 {offsets = [2, 0], sizes = [1, 32], strides = [1, 1]} : vector<4x32xf32> to vector<1x32xf32>
    %46 = vector.broadcast %44 : vector<8x1xf32> to vector<8x32xf32>
    %47 = vector.broadcast %45 : vector<1x32xf32> to vector<8x32xf32>
    %48 = arith.mulf %46, %47 : vector<8x32xf32>
    %49 = arith.addf %43, %48 : vector<8x32xf32>
    %50 = vector.extract_strided_slice %26 {offsets = [0, 3], sizes = [8, 1], strides = [1, 1]} : vector<8x4xf32> to vector<8x1xf32>
    %51 = vector.extract_strided_slice %30 {offsets = [3, 0], sizes = [1, 32], strides = [1, 1]} : vector<4x32xf32> to vector<1x32xf32>
    %52 = vector.broadcast %50 : vector<8x1xf32> to vector<8x32xf32>
    %53 = vector.broadcast %51 : vector<1x32xf32> to vector<8x32xf32>
    %54 = arith.mulf %52, %53 : vector<8x32xf32>
    %55 = arith.addf %49, %54 : vector<8x32xf32>
    %56 = arith.mulf %17, %55 : vector<8x32xf32>
    %c0_16 = arith.constant 0 : index
    %c0_17 = arith.constant 0 : index
    %57 = vector.load %arg6[%c0_16, %c0_17] : memref<32x32xf32, #tpu.memory_space<vmem>>, vector<32x32xf32>
    %cst_18 = arith.constant dense<0.000000e+00> : vector<8x32xf32>
    %58 = tpu.matmul %56, %57, %cst_18 {dimension_numbers = #tpu.dot_dimension_numbers<[1], [0], [0], [1], [0, 0, 1, 1], [], []>} : vector<8x32xf32>, vector<32x32xf32>, vector<8x32xf32> -> vector<8x32xf32>
    %c0_19 = arith.constant 0 : index
    %c0_20 = arith.constant 0 : index
    %c0_21 = arith.constant 0 : index
    %59 = vector.load %arg8[%c0_19, %c0_20, %c0_21] : memref<1x8x32xf32, #tpu.memory_space<vmem>>, vector<1x8x32xf32>
    %60 = vector.shape_cast %59 : vector<1x8x32xf32> to vector<8x32xf32>
    %61 = vector.shape_cast %58 : vector<8x32xf32> to vector<1x8x32xf32>
    tpu.vector_store %arg8[%c0_19, %c0_20, %c0_21], %61 {strides = array<i32>} : memref<1x8x32xf32, #tpu.memory_space<vmem>>, vector<1x8x32xf32>,
    %c0_i32 = arith.constant 0 : i32
    %62 = arith.cmpi eq, %arg1, %c0_i32 : i32
    %63 = arith.extui %62 : i1 to i32
    %c0_i32_22 = arith.constant 0 : i32
    %64 = arith.cmpi ne, %63, %c0_i32_22 : i32
    scf.if %64 {
      %65 = vector.extract_strided_slice %31 {offsets = [7, 0], sizes = [1, 32], strides = [1, 1]} : vector<8x32xf32> to vector<1x32xf32>
      %66 = vector.broadcast %65 : vector<1x32xf32> to vector<4x32xf32>
      %67 = arith.addf %30, %66 : vector<4x32xf32>
      %c0_23 = arith.constant 0 : index
      %c0_24 = arith.constant 0 : index
      %c0_25 = arith.constant 0 : index
      %68 = vector.load %arg9[%c0_23, %c0_24, %c0_25] : memref<1x4x32xf32, #tpu.memory_space<vmem>>, vector<1x4x32xf32>
      %69 = vector.shape_cast %68 : vector<1x4x32xf32> to vector<4x32xf32>
      %70 = vector.shape_cast %67 : vector<4x32xf32> to vector<1x4x32xf32>
      tpu.vector_store %arg9[%c0_23, %c0_24, %c0_25], %70 {strides = array<i32>} : memref<1x4x32xf32, #tpu.memory_space<vmem>>, vector<1x4x32xf32>,
    } else {
    }
    return
  }
  func.func @transform_0(%arg0: i32, %arg1: i32) -> (i32, i32, i32) {
    %c0_i32 = arith.constant 0 : i32
    %c0_i32_0 = arith.constant 0 : i32
    return %arg0, %arg1, %c0_i32 : i32, i32, i32
  }
  func.func @transform_1(%arg0: i32, %arg1: i32) -> (i32, i32, i32) {
    %c0_i32 = arith.constant 0 : i32
    %c0_i32_0 = arith.constant 0 : i32
    %c0_i32_1 = arith.constant 0 : i32
    return %arg0, %c0_i32, %c0_i32_0 : i32, i32, i32
  }
  func.func @transform_2(%arg0: i32, %arg1: i32) -> (i32, i32) {
    %c0_i32 = arith.constant 0 : i32
    %c0_i32_0 = arith.constant 0 : i32
    %c0_i32_1 = arith.constant 0 : i32
    return %c0_i32, %c0_i32_0 : i32, i32
  }
  func.func @transform_3(%arg0: i32, %arg1: i32) -> (i32, i32) {
    %c0_i32 = arith.constant 0 : i32
    %c0_i32_0 = arith.constant 0 : i32
    %c0_i32_1 = arith.constant 0 : i32
    return %c0_i32, %c0_i32_0 : i32, i32
  }
  func.func @transform_4(%arg0: i32, %arg1: i32) -> (i32, i32) {
    %c0_i32 = arith.constant 0 : i32
    %c0_i32_0 = arith.constant 0 : i32
    %c0_i32_1 = arith.constant 0 : i32
    return %c0_i32, %c0_i32_0 : i32, i32
  }
  func.func @transform_5(%arg0: i32, %arg1: i32) -> (i32, i32) {
    %c0_i32 = arith.constant 0 : i32
    %c0_i32_0 = arith.constant 0 : i32
    %c0_i32_1 = arith.constant 0 : i32
    return %c0_i32, %c0_i32_0 : i32, i32
  }
  func.func @transform_6(%arg0: i32, %arg1: i32) -> (i32, i32, i32) {
    %c0_i32 = arith.constant 0 : i32
    %c0_i32_0 = arith.constant 0 : i32
    return %arg0, %arg1, %c0_i32 : i32, i32, i32
  }
  func.func @transform_7(%arg0: i32, %arg1: i32) -> (i32, i32, i32) {
    %c0_i32 = arith.constant 0 : i32
    %c0_i32_0 = arith.constant 0 : i32
    %c0_i32_1 = arith.constant 0 : i32
    return %arg0, %c0_i32, %c0_i32_0 : i32, i32, i32
  }
}

module attributes {stable_mosaic.version = 11 : i64} {
  func.func @_hta_kernel(%arg0: i32, %arg1: i32, %arg2: memref<1x8x32xf32, #tpu.memory_space<vmem>>, %arg3: memref<1x4x32xf32, #tpu.memory_space<vmem>>, %arg4: memref<32x512xf32, #tpu.memory_space<vmem>>, %arg5: memref<1x4xf32, #tpu.memory_space<vmem>>, %arg6: memref<32x32xf32, #tpu.memory_space<vmem>>, %arg7: memref<4x32xf32, #tpu.memory_space<vmem>>, %arg8: memref<1x8x32xf32, #tpu.memory_space<vmem>>, %arg9: memref<1x4x32xf32, #tpu.memory_space<vmem>>) attributes {dimension_semantics = [#tpu.dimension_semantics<parallel>, #tpu.dimension_semantics<arbitrary>], iteration_bounds = array<i64: 2, 1>, scalar_prefetch = 0 : i64, scratch_operands = 0 : i64, tpu.core_type = #tpu.core_type<tc>, window_params = [{transform_indices = @transform_0, window_bounds = array<i64: 1, 8, 32>}, {transform_indices = @transform_1, window_bounds = array<i64: 1, 4, 32>}, {pipeline_mode = #tpu.pipeline_mode<synchronous>, transform_indices = @transform_2, window_bounds = array<i64: 32, 512>}, {pipeline_mode = #tpu.pipeline_mode<synchronous>, transform_indices = @transform_3, window_bounds = array<i64: 1, 4>}, {pipeline_mode = #tpu.pipeline_mode<synchronous>, transform_indices = @transform_4, window_bounds = array<i64: 32, 32>}, {pipeline_mode = #tpu.pipeline_mode<synchronous>, transform_indices = @transform_5, window_bounds = array<i64: 4, 32>}, {transform_indices = @transform_6, window_bounds = array<i64: 1, 8, 32>}, {transform_indices = @transform_7, window_bounds = array<i64: 1, 4, 32>}]} {
    %c0 = arith.constant 0 : index
    %c0_0 = arith.constant 0 : index
    %c0_1 = arith.constant 0 : index
    %0 = vector.load %arg2[%c0, %c0_0, %c0_1] : memref<1x8x32xf32, #tpu.memory_space<vmem>>, vector<1x8x32xf32>
    %1 = vector.shape_cast %0 : vector<1x8x32xf32> to vector<8x32xf32>
    %c0_2 = arith.constant 0 : index
    %c0_3 = arith.constant 0 : index
    %2 = vector.load %arg4[%c0_2, %c0_3] : memref<32x512xf32, #tpu.memory_space<vmem>>, vector<32x512xf32>
    %cst = arith.constant dense<0.000000e+00> : vector<8x512xf32>
    %3 = tpu.matmul %1, %2, %cst {dimension_numbers = #tpu.dot_dimension_numbers<[1], [0], [0], [1], [0, 0, 1, 1], [], []>} : vector<8x32xf32>, vector<32x512xf32>, vector<8x512xf32> -> vector<8x512xf32>
    %4 = vector.extract_strided_slice %3 {offsets = [0, 0], sizes = [8, 32], strides = [1, 1]} : vector<8x512xf32> to vector<8x32xf32>
    %5 = vector.extract_strided_slice %3 {offsets = [0, 128], sizes = [8, 32], strides = [1, 1]} : vector<8x512xf32> to vector<8x32xf32>
    %6 = vector.extract_strided_slice %3 {offsets = [0, 256], sizes = [8, 32], strides = [1, 1]} : vector<8x512xf32> to vector<8x32xf32>
    %7 = vector.extract_strided_slice %3 {offsets = [0, 384], sizes = [8, 4], strides = [1, 1]} : vector<8x512xf32> to vector<8x4xf32>
    %c0_4 = arith.constant 0 : index
    %c0_5 = arith.constant 0 : index
    %8 = vector.load %arg5[%c0_4, %c0_5] : memref<1x4xf32, #tpu.memory_space<vmem>>, vector<1x4xf32>
    %9 = vector.broadcast %8 : vector<1x4xf32> to vector<8x4xf32>
    %10 = arith.addf %7, %9 : vector<8x4xf32>
    %cst_6 = arith.constant 0.000000e+00 : f32
    %11 = vector.broadcast %cst_6 : f32 to vector<8x32xf32>
    %12 = arith.subf %11, %6 : vector<8x32xf32>
    %13 = math.exp %12 : vector<8x32xf32>
    %cst_7 = arith.constant 1.000000e+00 : f32
    %14 = vector.broadcast %cst_7 : f32 to vector<8x32xf32>
    %15 = arith.addf %14, %13 : vector<8x32xf32>
    %cst_8 = arith.constant 1.000000e+00 : f32
    %16 = vector.broadcast %cst_8 : f32 to vector<8x32xf32>
    %17 = arith.divf %16, %15 : vector<8x32xf32>
    %cst_9 = arith.constant dense<0xFF800000> : vector<8xf32>
    %18 = vector.multi_reduction <maximumf>, %10, %cst_9 [1] : vector<8x4xf32> to vector<8xf32>
    %19 = vector.shape_cast %18 : vector<8xf32> to vector<8x1xf32>
    %20 = vector.broadcast %19 : vector<8x1xf32> to vector<8x4xf32>
    %21 = arith.subf %10, %20 : vector<8x4xf32>
    %22 = math.exp %21 : vector<8x4xf32>
    %cst_10 = arith.constant dense<0.000000e+00> : vector<8xf32>
    %23 = vector.multi_reduction <add>, %22, %cst_10 [1] : vector<8x4xf32> to vector<8xf32>
    %24 = vector.shape_cast %23 : vector<8xf32> to vector<8x1xf32>
    %25 = vector.broadcast %24 : vector<8x1xf32> to vector<8x4xf32>
    %26 = arith.divf %22, %25 : vector<8x4xf32>
    %c0_11 = arith.constant 0 : index
    %c0_12 = arith.constant 0 : index
    %c0_13 = arith.constant 0 : index
    %27 = vector.load %arg3[%c0_11, %c0_12, %c0_13] : memref<1x4x32xf32, #tpu.memory_space<vmem>>, vector<1x4x32xf32>
    %28 = vector.shape_cast %27 : vector<1x4x32xf32> to vector<4x32xf32>
    %c0_14 = arith.constant 0 : index
    %c0_15 = arith.constant 0 : index
    %29 = vector.load %arg7[%c0_14, %c0_15] : memref<4x32xf32, #tpu.memory_space<vmem>>, vector<4x32xf32>
    %30 = arith.mulf %28, %29 : vector<4x32xf32>
    %31 = arith.mulf %5, %4 : vector<8x32xf32>
    %32 = vector.extract_strided_slice %26 {offsets = [0, 0], sizes = [8, 1], strides = [1, 1]} : vector<8x4xf32> to vector<8x1xf32>
    %33 = vector.extract_strided_slice %30 {offsets = [0, 0], sizes = [1, 32], strides = [1, 1]} : vector<4x32xf32> to vector<1x32xf32>
    %34 = vector.broadcast %32 : vector<8x1xf32> to vector<8x32xf32>
    %35 = vector.broadcast %33 : vector<1x32xf32> to vector<8x32xf32>
    %36 = arith.mulf %34, %35 : vector<8x32xf32>
    %37 = arith.addf %31, %36 : vector<8x32xf32>
    %38 = vector.extract_strided_slice %26 {offsets = [0, 1], sizes = [8, 1], strides = [1, 1]} : vector<8x4xf32> to vector<8x1xf32>
    %39 = vector.extract_strided_slice %30 {offsets = [1, 0], sizes = [1, 32], strides = [1, 1]} : vector<4x32xf32> to vector<1x32xf32>
    %40 = vector.broadcast %38 : vector<8x1xf32> to vector<8x32xf32>
    %41 = vector.broadcast %39 : vector<1x32xf32> to vector<8x32xf32>
    %42 = arith.mulf %40, %41 : vector<8x32xf32>
    %43 = arith.addf %37, %42 : vector<8x32xf32>
    %44 = vector.extract_strided_slice %26 {offsets = [0, 2], sizes = [8, 1], strides = [1, 1]} : vector<8x4xf32> to vector<8x1xf32>
    %45 = vector.extract_strided_slice %30 {offsets = [2, 0], sizes = [1, 32], strides = [1, 1]} : vector<4x32xf32> to vector<1x32xf32>
    %46 = vector.broadcast %44 : vector<8x1xf32> to vector<8x32xf32>
    %47 = vector.broadcast %45 : vector<1x32xf32> to vector<8x32xf32>
    %48 = arith.mulf %46, %47 : vector<8x32xf32>
    %49 = arith.addf %43, %48 : vector<8x32xf32>
    %50 = vector.extract_strided_slice %26 {offsets = [0, 3], sizes = [8, 1], strides = [1, 1]} : vector<8x4xf32> to vector<8x1xf32>
    %51 = vector.extract_strided_slice %30 {offsets = [3, 0], sizes = [1, 32], strides = [1, 1]} : vector<4x32xf32> to vector<1x32xf32>
    %52 = vector.broadcast %50 : vector<8x1xf32> to vector<8x32xf32>
    %53 = vector.broadcast %51 : vector<1x32xf32> to vector<8x32xf32>
    %54 = arith.mulf %52, %53 : vector<8x32xf32>
    %55 = arith.addf %49, %54 : vector<8x32xf32>
    %56 = arith.mulf %17, %55 : vector<8x32xf32>
    %c0_16 = arith.constant 0 : index
    %c0_17 = arith.constant 0 : index
    %57 = vector.load %arg6[%c0_16, %c0_17] : memref<32x32xf32, #tpu.memory_space<vmem>>, vector<32x32xf32>
    %cst_18 = arith.constant dense<0.000000e+00> : vector<8x32xf32>
    %58 = tpu.matmul %56, %57, %cst_18 {dimension_numbers = #tpu.dot_dimension_numbers<[1], [0], [0], [1], [0, 0, 1, 1], [], []>} : vector<8x32xf32>, vector<32x32xf32>, vector<8x32xf32> -> vector<8x32xf32>
    %c0_19 = arith.constant 0 : index
    %c0_20 = arith.constant 0 : index
    %c0_21 = arith.constant 0 : index
    %59 = vector.load %arg8[%c0_19, %c0_20, %c0_21] : memref<1x8x32xf32, #tpu.memory_space<vmem>>, vector<1x8x32xf32>
    %60 = vector.shape_cast %59 : vector<1x8x32xf32> to vector<8x32xf32>
    %61 = vector.shape_cast %58 : vector<8x32xf32> to vector<1x8x32xf32>
    tpu.vector_store %arg8[%c0_19, %c0_20, %c0_21], %61 {strides = array<i32>} : memref<1x8x32xf32, #tpu.memory_space<vmem>>, vector<1x8x32xf32>,
    %c0_i32 = arith.constant 0 : i32
    %62 = arith.cmpi eq, %arg1, %c0_i32 : i32
    %63 = arith.extui %62 : i1 to i32
    %c0_i32_22 = arith.constant 0 : i32
    %64 = arith.cmpi ne, %63, %c0_i32_22 : i32
    scf.if %64 {
      %65 = vector.extract_strided_slice %31 {offsets = [7, 0], sizes = [1, 32], strides = [1, 1]} : vector<8x32xf32> to vector<1x32xf32>
      %66 = vector.broadcast %65 : vector<1x32xf32> to vector<4x32xf32>
      %67 = arith.addf %30, %66 : vector<4x32xf32>
      %c0_23 = arith.constant 0 : index
      %c0_24 = arith.constant 0 : index
      %c0_25 = arith.constant 0 : index
      %68 = vector.load %arg9[%c0_23, %c0_24, %c0_25] : memref<1x4x32xf32, #tpu.memory_space<vmem>>, vector<1x4x32xf32>
      %69 = vector.shape_cast %68 : vector<1x4x32xf32> to vector<4x32xf32>
      %70 = vector.shape_cast %67 : vector<4x32xf32> to vector<1x4x32xf32>
      tpu.vector_store %arg9[%c0_23, %c0_24, %c0_25], %70 {strides = array<i32>} : memref<1x4x32xf32, #tpu.memory_space<vmem>>, vector<1x4x32xf32>,
    } else {
    }
    return
  }
  func.func @transform_0(%arg0: i32, %arg1: i32) -> (i32, i32, i32) {
    %c0_i32 = arith.constant 0 : i32
    %c0_i32_0 = arith.constant 0 : i32
    return %arg0, %arg1, %c0_i32 : i32, i32, i32
  }
  func.func @transform_1(%arg0: i32, %arg1: i32) -> (i32, i32, i32) {
    %c0_i32 = arith.constant 0 : i32
    %c0_i32_0 = arith.constant 0 : i32
    %c0_i32_1 = arith.constant 0 : i32
    return %arg0, %c0_i32, %c0_i32_0 : i32, i32, i32
  }
  func.func @transform_2(%arg0: i32, %arg1: i32) -> (i32, i32) {
    %c0_i32 = arith.constant 0 : i32
    %c0_i32_0 = arith.constant 0 : i32
    %c0_i32_1 = arith.constant 0 : i32
    return %c0_i32, %c0_i32_0 : i32, i32
  }
  func.func @transform_3(%arg0: i32, %arg1: i32) -> (i32, i32) {
    %c0_i32 = arith.constant 0 : i32
    %c0_i32_0 = arith.constant 0 : i32
    %c0_i32_1 = arith.constant 0 : i32
    return %c0_i32, %c0_i32_0 : i32, i32
  }
  func.func @transform_4(%arg0: i32, %arg1: i32) -> (i32, i32) {
    %c0_i32 = arith.constant 0 : i32
    %c0_i32_0 = arith.constant 0 : i32
    %c0_i32_1 = arith.constant 0 : i32
    return %c0_i32, %c0_i32_0 : i32, i32
  }
  func.func @transform_5(%arg0: i32, %arg1: i32) -> (i32, i32) {
    %c0_i32 = arith.constant 0 : i32
    %c0_i32_0 = arith.constant 0 : i32
    %c0_i32_1 = arith.constant 0 : i32
    return %c0_i32, %c0_i32_0 : i32, i32
  }
  func.func @transform_6(%arg0: i32, %arg1: i32) -> (i32, i32, i32) {
    %c0_i32 = arith.constant 0 : i32
    %c0_i32_0 = arith.constant 0 : i32
    return %arg0, %arg1, %c0_i32 : i32, i32, i32
  }
  func.func @transform_7(%arg0: i32, %arg1: i32) -> (i32, i32, i32) {
    %c0_i32 = arith.constant 0 : i32
    %c0_i32_0 = arith.constant 0 : i32
    %c0_i32_1 = arith.constant 0 : i32
    return %arg0, %c0_i32, %c0_i32_0 : i32, i32, i32
  }
}

</mosaic_0001>

<llo_original>
// kernel: tpu_custom_call.1
$region0: #{tpu_custom_call.1}
  #allocation0 [shape = 'u32[]', space=smem, size = 0x4, offset = 0x4, fixed_abs, tag = 'smem constant byte address 0x4 - core index']
  #allocation1 [shape = 'u32[144,128]{1,0:T(1,128)}', space=vmem, size = 0x12000, scoped, tag = 'internal scratch']
  %s0 = inlined_call_operand.hbm [shape: f32[2,8,32], index: 0, kind: input, shape index: {}]
  %s1 = inlined_call_operand.hbm [shape: f32[2,4,32], index: 1, kind: input, shape index: {}]
  %s2 = inlined_call_operand.hbm [shape: f32[32,512], index: 2, kind: input, shape index: {}]
  %s3 = inlined_call_operand.vmem [shape: f32[1,4], index: 3, kind: input, shape index: {}]
  %s4 = inlined_call_operand.hbm [shape: f32[32,32], index: 4, kind: input, shape index: {}]
  %s5 = inlined_call_operand.vmem [shape: f32[4,32], index: 5, kind: input, shape index: {}]
  %s6 = inlined_call_operand.hbm [shape: f32[2,8,32], index: 6, kind: output, shape index: {0}]
  %s7 = inlined_call_operand.hbm [shape: f32[2,4,32], index: 7, kind: output, shape index: {1}]
  %8 = xla_tuple %s6, %s7
  %s9 = sld [smem:[#allocation0]]
  $region85: #{tpu_custom_call.1} parent=0
    _
  %s11 = ssub.s32 1, %s9
  %s12 = scalar_select 0, %s11, %s9
  $region1: #{tpu_custom_call.1} parent=0
    #allocation2 [shape = 'u8[8192]{0}', space=vmem, size = 0x2000, scoped, tag = 'input window, operand 0']
    #allocation3 [shape = 's32[2]{0}', space=sflag, size = 0x8, scoped, tag = 'scoped memory for tpu_custom_call.1']
    #allocation4 [shape = 's32[2]{0}', space=sflag, size = 0x8, scoped, tag = 'scoped memory for tpu_custom_call.1']
    #allocation5 [shape = 'u8[4096]{0}', space=vmem, size = 0x1000, scoped, tag = 'input window, operand 1']
    #allocation6 [shape = 's32[2]{0}', space=sflag, size = 0x8, scoped, tag = 'scoped memory for tpu_custom_call.1']
    #allocation7 [shape = 'u8[65536]{0}', space=vmem, size = 0x10000, scoped, tag = 'input window, operand 2, single buffered']
    #allocation8 [shape = 'u8[16384]{0}', space=vmem, size = 0x4000, scoped, tag = 'input window, operand 4, single buffered']
    #allocation9 [shape = 's32[1]{0}', space=sflag, size = 0x4, scoped, tag = 'scoped memory for tpu_custom_call.1']
    #allocation10 [shape = 'u8[8192]{0}', space=vmem, size = 0x2000, scoped, tag = 'output window, operand 0']
    #allocation11 [shape = 'u8[4096]{0}', space=vmem, size = 0x1000, scoped, tag = 'output window, operand 1']
    #allocation12 [shape = 's32[2]{0}', space=sflag, size = 0x8, scoped, tag = 'scoped memory for tpu_custom_call.1']
    %13 = vsyncpa [#allocation3], 0
    %s14 = scalar_lea.sflag [#allocation3], 1
    %15 = vsyncpa %s14, 0
    %16 = vsyncpa [#allocation6], 0
    %s17 = scalar_lea.sflag [#allocation6], 1
    %18 = vsyncpa %s17, 0
    %19 = vsyncpa [#allocation9], 0
    %20 = vsyncpa [#allocation4], 0
    %s21 = scalar_lea.sflag [#allocation4], 1
    %22 = vsyncpa %s21, 0
    %23 = vsyncpa [#allocation12], 0
    %s24 = scalar_lea.sflag [#allocation12], 1
    %25 = vsyncpa %s24, 0
    loop: start=0, step=1, limit=4
    $region2: #{tpu_custom_call.1} parent=1 // loop_pre_header
      _
    $region3: #{tpu_custom_call.1} parent=1 // loop_header
      %s27 = sphi 0, %s31
      %p28 = scmp.ge.s32.totalorder %s27, 4
      %s34 = sphi 0, %s46
      %s35 = sphi 0, %s42
      %s36 = sphi 0, %s34
      %s37 = sphi 0, %s35
      %s38 = sphi 0, %s36
      %s39 = sphi 0, %s37
      %s51 = sphi 0, %s53
      %s54 = sphi 0, %s51
      %s55 = sphi 0, %s54
      %s71 = sphi 0, %s55
      %s77 = sphi 0, %s79
      %s80 = sphi 0, %s77
      %s81 = sphi 0, %s80
      %s97 = sphi 0, %s81
      %s101 = sphi 0, %s101
      %s103 = sphi 0, %s101
      %s104 = sphi 0, %s103
      %s118 = sphi 0, %s104
      %s122 = sphi 0, %s122
      %s124 = sphi 0, %s122
      %s125 = sphi 0, %s124
      %s139 = sphi 0, %s125
      %s143 = sphi 0, %s143
      %s145 = sphi 0, %s143
      %s146 = sphi 0, %s145
      %s160 = sphi 0, %s146
      %s164 = sphi 0, %s164
      %s166 = sphi 0, %s164
      %s167 = sphi 0, %s166
      %s181 = sphi 0, %s167
      %s189 = sphi 0, %s191
      %s192 = sphi 0, %s189
      %s193 = sphi 0, %s192
      %s209 = sphi 0, %s193
      %s215 = sphi 0, %s217
      %s218 = sphi 0, %s215
      %s219 = sphi 0, %s218
      %s235 = sphi 0, %s219
    $region4: #{tpu_custom_call.1} parent=1 // loop_header_branch
      %30 = sbr.rel (%p28) target = $region8
    $region5: #{tpu_custom_call.1} parent=1 // loop_body
      %s32 = ssub.s32 %s27, 1
      %s33 = ssub.s32 %s27, 2
      %s40 = sadd.s32 1, %s35
      %p41 = scmp.ge.s32.totalorder %s40, 1
      %s42 = scalar_select %p41, 0, %s40
      %s43 = sadd.s32 1, %s34
      %s44 = scalar_select %p41, %s43, %s34
      %p45 = scmp.ge.s32.totalorder %s44, 2
      %s46 = scalar_select %p45, 0, %s44
      %s47 = ssub.s32 %s34, %s46
      %s48 = ssub.s32 %s35, %s42
      %s49 = sor.u32 %s47, %s48
      %p50 = scmp.eq.s32.totalorder %s49, 0
      %s52 = sadd.s32 %s51, 1
      %s53 = scalar_select %p50, %s51, %s52
      %p56 = pneg %p50
      %p57 = scmp.eq.s32.totalorder %s27, 1
      %p58 = por %p56, %p57
      %p59 = scmp.ne.s32.totalorder %s51, %s54
      %p60 = scmp.eq.s32.totalorder %s27, 0
      %p61 = por %p59, %p60
      %p62 = scmp.ne.s32.totalorder %s51, %s54
      %p63 = scmp.eq.s32.totalorder %s32, 1
      %p64 = por %p62, %p63
      %p65 = scmp.ne.s32.totalorder %s54, %s55
      %p66 = scmp.eq.s32.totalorder %s32, 0
      %p67 = por %p65, %p66
      %p68 = scmp.ne.s32.totalorder %s54, %s55
      %p69 = scmp.eq.s32.totalorder %s33, 1
      %p70 = por %p68, %p69
      %p72 = scmp.ne.s32.totalorder %s55, %s71
      %p73 = scmp.eq.s32.totalorder %s33, 0
      %p74 = por %p72, %p73
      %s75 = ssub.s32 %s34, %s46
      %p76 = scmp.eq.s32.totalorder %s75, 0
      %s78 = sadd.s32 %s77, 1
      %s79 = scalar_select %p76, %s77, %s78
      %p82 = pneg %p76
      %p83 = scmp.eq.s32.totalorder %s27, 1
      %p84 = por %p82, %p83
      %p85 = scmp.ne.s32.totalorder %s77, %s80
      %p86 = scmp.eq.s32.totalorder %s27, 0
      %p87 = por %p85, %p86
      %p88 = scmp.ne.s32.totalorder %s77, %s80
      %p89 = scmp.eq.s32.totalorder %s32, 1
      %p90 = por %p88, %p89
      %p91 = scmp.ne.s32.totalorder %s80, %s81
      %p92 = scmp.eq.s32.totalorder %s32, 0
      %p93 = por %p91, %p92
      %p94 = scmp.ne.s32.totalorder %s80, %s81
      %p95 = scmp.eq.s32.totalorder %s33, 1
      %p96 = por %p94, %p95
      %p98 = scmp.ne.s32.totalorder %s81, %s97
      %p99 = scmp.eq.s32.totalorder %s33, 0
      %p100 = por %p98, %p99
      %s102 = sadd.s32 %s101, 1
      %p105 = scmp.eq.s32.totalorder %s27, 1
      %p106 = scmp.ne.s32.totalorder %s101, %s103
      %p107 = scmp.eq.s32.totalorder %s27, 0
      %p108 = por %p106, %p107
      %p109 = scmp.ne.s32.totalorder %s101, %s103
      %p110 = scmp.eq.s32.totalorder %s32, 1
      %p111 = por %p109, %p110
      %p112 = scmp.ne.s32.totalorder %s103, %s104
      %p113 = scmp.eq.s32.totalorder %s32, 0
      %p114 = por %p112, %p113
      %p115 = scmp.ne.s32.totalorder %s103, %s104
      %p116 = scmp.eq.s32.totalorder %s33, 1
      %p117 = por %p115, %p116
      %p119 = scmp.ne.s32.totalorder %s104, %s118
      %p120 = scmp.eq.s32.totalorder %s33, 0
      %p121 = por %p119, %p120
      %s123 = sadd.s32 %s122, 1
      %p126 = scmp.eq.s32.totalorder %s27, 1
      %p127 = scmp.ne.s32.totalorder %s122, %s124
      %p128 = scmp.eq.s32.totalorder %s27, 0
      %p129 = por %p127, %p128
      %p130 = scmp.ne.s32.totalorder %s122, %s124
      %p131 = scmp.eq.s32.totalorder %s32, 1
      %p132 = por %p130, %p131
      %p133 = scmp.ne.s32.totalorder %s124, %s125
      %p134 = scmp.eq.s32.totalorder %s32, 0
      %p135 = por %p133, %p134
      %p136 = scmp.ne.s32.totalorder %s124, %s125
      %p137 = scmp.eq.s32.totalorder %s33, 1
      %p138 = por %p136, %p137
      %p140 = scmp.ne.s32.totalorder %s125, %s139
      %p141 = scmp.eq.s32.totalorder %s33, 0
      %p142 = por %p140, %p141
      %s144 = sadd.s32 %s143, 1
      %p147 = scmp.eq.s32.totalorder %s27, 1
      %p148 = scmp.ne.s32.totalorder %s143, %s145
      %p149 = scmp.eq.s32.totalorder %s27, 0
      %p150 = por %p148, %p149
      %p151 = scmp.ne.s32.totalorder %s143, %s145
      %p152 = scmp.eq.s32.totalorder %s32, 1
      %p153 = por %p151, %p152
      %p154 = scmp.ne.s32.totalorder %s145, %s146
      %p155 = scmp.eq.s32.totalorder %s32, 0
      %p156 = por %p154, %p155
      %p157 = scmp.ne.s32.totalorder %s145, %s146
      %p158 = scmp.eq.s32.totalorder %s33, 1
      %p159 = por %p157, %p158
      %p161 = scmp.ne.s32.totalorder %s146, %s160
      %p162 = scmp.eq.s32.totalorder %s33, 0
      %p163 = por %p161, %p162
      %s165 = sadd.s32 %s164, 1
      %p168 = scmp.eq.s32.totalorder %s27, 1
      %p169 = scmp.ne.s32.totalorder %s164, %s166
      %p170 = scmp.eq.s32.totalorder %s27, 0
      %p171 = por %p169, %p170
      %p172 = scmp.ne.s32.totalorder %s164, %s166
      %p173 = scmp.eq.s32.totalorder %s32, 1
      %p174 = por %p172, %p173
      %p175 = scmp.ne.s32.totalorder %s166, %s167
      %p176 = scmp.eq.s32.totalorder %s32, 0
      %p177 = por %p175, %p176
      %p178 = scmp.ne.s32.totalorder %s166, %s167
      %p179 = scmp.eq.s32.totalorder %s33, 1
      %p180 = por %p178, %p179
      %p182 = scmp.ne.s32.totalorder %s167, %s181
      %p183 = scmp.eq.s32.totalorder %s33, 0
      %p184 = por %p182, %p183
      %s185 = ssub.s32 %s34, %s46
      %s186 = ssub.s32 %s35, %s42
      %s187 = sor.u32 %s185, %s186
      %p188 = scmp.eq.s32.totalorder %s187, 0
      %s190 = sadd.s32 %s189, 1
      %s191 = scalar_select %p188, %s189, %s190
      %p194 = pneg %p188
      %p195 = scmp.eq.s32.totalorder %s27, 1
      %p196 = por %p194, %p195
      %p197 = scmp.ne.s32.totalorder %s189, %s192
      %p198 = scmp.eq.s32.totalorder %s27, 0
      %p199 = por %p197, %p198
      %p200 = scmp.ne.s32.totalorder %s189, %s192
      %p201 = scmp.eq.s32.totalorder %s32, 1
      %p202 = por %p200, %p201
      %p203 = scmp.ne.s32.totalorder %s192, %s193
      %p204 = scmp.eq.s32.totalorder %s32, 0
      %p205 = por %p203, %p204
      %p206 = scmp.ne.s32.totalorder %s192, %s193
      %p207 = scmp.eq.s32.totalorder %s33, 1
      %p208 = por %p206, %p207
      %p210 = scmp.ne.s32.totalorder %s193, %s209
      %p211 = scmp.eq.s32.totalorder %s33, 0
      %p212 = por %p210, %p211
      %s213 = ssub.s32 %s34, %s46
      %p214 = scmp.eq.s32.totalorder %s213, 0
      %s216 = sadd.s32 %s215, 1
      %s217 = scalar_select %p214, %s215, %s216
      %p220 = pneg %p214
      %p221 = scmp.eq.s32.totalorder %s27, 1
      %p222 = por %p220, %p221
      %p223 = scmp.ne.s32.totalorder %s215, %s218
      %p224 = scmp.eq.s32.totalorder %s27, 0
      %p225 = por %p223, %p224
      %p226 = scmp.ne.s32.totalorder %s215, %s218
      %p227 = scmp.eq.s32.totalorder %s32, 1
      %p228 = por %p226, %p227
      %p229 = scmp.ne.s32.totalorder %s218, %s219
      %p230 = scmp.eq.s32.totalorder %s32, 0
      %p231 = por %p229, %p230
      %p232 = scmp.ne.s32.totalorder %s218, %s219
      %p233 = scmp.eq.s32.totalorder %s33, 1
      %p234 = por %p232, %p233
      %p236 = scmp.ne.s32.totalorder %s219, %s235
      %p237 = scmp.eq.s32.totalorder %s33, 0
      %p238 = por %p236, %p237
      %p239 = scmp.le.s32.totalorder 1, %s27
      %p240 = scmp.lt.s32.totalorder %s27, 3
      %p241 = pnand %p239, %p240
      %p242 = pneg %p241
      // Predicated region
      $region9: #{tpu_custom_call.1} parent=5 // pred_check
        _
      $region10: #{tpu_custom_call.1} parent=5 // pred_check_branch
        %244 = sbr.rel (%p241) target = $region12
      $region11: #{tpu_custom_call.1} parent=5 // pred_region
        %s245 = ssub.s32 %s27, 1
        // Predicated region
        $region13: #{tpu_custom_call.1} parent=11 // pred_check
          %p246 = pneg %p114
        $region14: #{tpu_custom_call.1} parent=11 // pred_check_branch
          %248 = sbr.rel (%p246) target = $region16
        $region15: #{tpu_custom_call.1} parent=11 // pred_region
          %s250 = ssub.s32 2048, 2048
          %251 = vsyncadd [#allocation6], %s250
          %s252 = sshll.u32 [#allocation7], 4
          %s253 = int_to_ptr.vmem [resolvable:$true] %s252
          %258 = dma.hbm_to_vmem [thread:$0]  %s2, 2048, %s253, [#allocation6], 512, 512, 32
        $region16: #{tpu_custom_call.1} parent=11 // pred_fallthru
          _
        // Predicated region
        $region17: #{tpu_custom_call.1} parent=11 // pred_check
          %p259 = pneg %p135
        $region18: #{tpu_custom_call.1} parent=11 // pred_check_branch
          %261 = sbr.rel (%p259) target = $region20
        $region19: #{tpu_custom_call.1} parent=11 // pred_region
          _
        $region20: #{tpu_custom_call.1} parent=11 // pred_fallthru
          _
        // Predicated region
        $region21: #{tpu_custom_call.1} parent=11 // pred_check
          %p262 = pneg %p156
        $region22: #{tpu_custom_call.1} parent=11 // pred_check_branch
          %264 = sbr.rel (%p262) target = $region24
        $region23: #{tpu_custom_call.1} parent=11 // pred_region
          %s266 = ssub.s32 512, 512
          %267 = vsyncadd [#allocation9], %s266
          %s268 = sshll.u32 [#allocation8], 4
          %s269 = int_to_ptr.vmem [resolvable:$true] %s268
          %274 = dma.hbm_to_vmem [thread:$0]  %s4, 512, %s269, [#allocation9], 128, 128, 8
        $region24: #{tpu_custom_call.1} parent=11 // pred_fallthru
          _
        // Predicated region
        $region25: #{tpu_custom_call.1} parent=11 // pred_check
          %p275 = pneg %p177
        $region26: #{tpu_custom_call.1} parent=11 // pred_check_branch
          %277 = sbr.rel (%p275) target = $region28
        $region27: #{tpu_custom_call.1} parent=11 // pred_region
          _
        $region28: #{tpu_custom_call.1} parent=11 // pred_fallthru
          _
      $region12: #{tpu_custom_call.1} parent=5 // pred_fallthru
        _
      %p278 = scmp.lt.s32.totalorder %s27, 2
      // Predicated region
      $region29: #{tpu_custom_call.1} parent=5 // pred_check
        %p279 = pneg %p278
      $region30: #{tpu_custom_call.1} parent=5 // pred_check_branch
        %281 = sbr.rel (%p279) target = $region32
      $region31: #{tpu_custom_call.1} parent=5 // pred_region
        // Predicated region
        $region33: #{tpu_custom_call.1} parent=31 // pred_check
          %p282 = pneg %p61
        $region34: #{tpu_custom_call.1} parent=31 // pred_check_branch
          %284 = sbr.rel (%p282) target = $region36
        $region35: #{tpu_custom_call.1} parent=31 // pred_region
          %s285 = sand.u32 %s51, 1
          %s286 = scalar_lea.sflag [#allocation3], %s285
          %s287 = sand.u32 %s51, 1
          %s288 = smul.addr %s287, 8
          %s289 = scalar_lea.vmem [#allocation2], %s288
          %s291 = ssub.s32 128, 128
          %292 = vsyncadd %s286, %s291
          %s293 = sadd.s32 %s35, %s34
          %s294 = smul.addr %s293, 128
          %s295 = scalar_lea.hbm %s0, %s294
          %s297 = sshll.u32 %s289, 4
          %s298 = int_to_ptr.vmem [resolvable:$true] %s297
          %300 = dma.hbm_to_vmem [thread:$0]  %s295, 128, %s298, %s286
        $region36: #{tpu_custom_call.1} parent=31 // pred_fallthru
          _
        // Predicated region
        $region37: #{tpu_custom_call.1} parent=31 // pred_check
          %p301 = pneg %p87
        $region38: #{tpu_custom_call.1} parent=31 // pred_check_branch
          %303 = sbr.rel (%p301) target = $region40
        $region39: #{tpu_custom_call.1} parent=31 // pred_region
          %s304 = sand.u32 %s27, 1
          %s305 = scalar_lea.sflag [#allocation6], %s304
          %s306 = sand.u32 %s77, 1
          %s307 = smul.addr %s306, 4
          %s308 = scalar_lea.vmem [#allocation5], %s307
          %s310 = ssub.s32 64, 64
          %311 = vsyncadd %s305, %s310
          %s312 = smul.addr %s34, 64
          %s313 = scalar_lea.hbm %s1, %s312
          %s315 = sshll.u32 %s308, 4
          %s316 = int_to_ptr.vmem [resolvable:$true] %s315
          %318 = dma.hbm_to_vmem [thread:$0]  %s313, 64, %s316, %s305
        $region40: #{tpu_custom_call.1} parent=31 // pred_fallthru
          _
      $region32: #{tpu_custom_call.1} parent=5 // pred_fallthru
        _
      %p319 = scmp.le.s32.totalorder 1, %s27
      %p320 = scmp.lt.s32.totalorder %s27, 3
      %p321 = pnand %p319, %p320
      %p322 = pneg %p321
      // Predicated region
      $region41: #{tpu_custom_call.1} parent=5 // pred_check
        _
      $region42: #{tpu_custom_call.1} parent=5 // pred_check_branch
        %324 = sbr.rel (%p321) target = $region44
      $region43: #{tpu_custom_call.1} parent=5 // pred_region
        %s325 = ssub.s32 %s27, 1
        %s326 = sand.u32 %s54, 1
        %s327 = scalar_lea.sflag [#allocation3], %s326
        %s328 = sand.u32 %s54, 1
        %s329 = smul.addr %s328, 8
        %s330 = scalar_lea.vmem [#allocation2], %s329
        // Predicated region
        $region45: #{tpu_custom_call.1} parent=43 // pred_check
          %p331 = pneg %p67
        $region46: #{tpu_custom_call.1} parent=43 // pred_check_branch
          %333 = sbr.rel (%p331) target = $region48
        $region47: #{tpu_custom_call.1} parent=43 // pred_region
          %334 = dma.done %s327, 128
        $region48: #{tpu_custom_call.1} parent=43 // pred_fallthru
          _
        %s335 = sand.u32 %s32, 1
        %s336 = scalar_lea.sflag [#allocation6], %s335
        %s337 = sand.u32 %s80, 1
        %s338 = smul.addr %s337, 4
        %s339 = scalar_lea.vmem [#allocation5], %s338
        // Predicated region
        $region49: #{tpu_custom_call.1} parent=43 // pred_check
          %p340 = pneg %p93
        $region50: #{tpu_custom_call.1} parent=43 // pred_check_branch
          %342 = sbr.rel (%p340) target = $region52
        $region51: #{tpu_custom_call.1} parent=43 // pred_region
          %343 = dma.done %s336, 64
        $region52: #{tpu_custom_call.1} parent=43 // pred_fallthru
          _
        // Predicated region
        $region53: #{tpu_custom_call.1} parent=43 // pred_check
          %p344 = pneg %p114
        $region54: #{tpu_custom_call.1} parent=43 // pred_check_branch
          %346 = sbr.rel (%p344) target = $region56
        $region55: #{tpu_custom_call.1} parent=43 // pred_region
          %347 = dma.done [#allocation6], 2048
        $region56: #{tpu_custom_call.1} parent=43 // pred_fallthru
          _
        // Predicated region
        $region57: #{tpu_custom_call.1} parent=43 // pred_check
          %p348 = pneg %p156
        $region58: #{tpu_custom_call.1} parent=43 // pred_check_branch
          %350 = sbr.rel (%p348) target = $region60
        $region59: #{tpu_custom_call.1} parent=43 // pred_region
          %351 = dma.done [#allocation9], 512
        $region60: #{tpu_custom_call.1} parent=43 // pred_fallthru
          _
        %s352 = sand.u32 %s54, 1
        %s353 = scalar_lea.sflag [#allocation3], %s352
        %s354 = sand.u32 %s54, 1
        %s355 = smul.addr %s354, 8
        %s356 = scalar_lea.vmem [#allocation2], %s355
        %p357 = pneg %p67
        %p358 = pneg %p64
        %s359 = sand.u32 %s32, 1
        %s360 = scalar_lea.sflag [#allocation6], %s359
        %s361 = sand.u32 %s80, 1
        %s362 = smul.addr %s361, 4
        %s363 = scalar_lea.vmem [#allocation5], %s362
        %p364 = pneg %p93
        %p365 = pneg %p90
        %p366 = pneg %p114
        %p367 = pneg %p111
        %p368 = pneg %p135
        %p369 = pneg %p132
        %p370 = pneg %p156
        %p371 = pneg %p153
        %p372 = pneg %p177
        %p373 = pneg %p174
        %p374 = pneg %p205
        %p375 = pneg %p202
        %s376 = sand.u32 %s192, 1
        %s377 = scalar_lea.sflag [#allocation4], %s376
        %s378 = sand.u32 %s192, 1
        %s379 = smul.addr %s378, 8
        %s380 = scalar_lea.vmem [#allocation10], %s379
        %p381 = pneg %p231
        %p382 = pneg %p228
        %s383 = sand.u32 %s218, 1
        %s384 = scalar_lea.sflag [#allocation12], %s383
        %s385 = sand.u32 %s218, 1
        %s386 = smul.addr %s385, 4
        %s387 = scalar_lea.vmem [#allocation11], %s386
        %v388 = vld [vmem:[%s330] sm:$0xff]
        %v389 = vld [vmem:[#allocation7] sm:$0xff]
        %v390 = vld [vmem:[#allocation7 + $0x8] sm:$0xff]
        %v391 = vld [vmem:[#allocation7 + $0x10] sm:$0xff]
        %v392 = vld [vmem:[#allocation7 + $0x18] sm:$0xff]
        %v393 = vld [vmem:[#allocation7 + $0x20] sm:$0xff]
        %v394 = vld [vmem:[#allocation7 + $0x28] sm:$0xff]
        %v395 = vld [vmem:[#allocation7 + $0x30] sm:$0xff]
        %v396 = vld [vmem:[#allocation7 + $0x38] sm:$0xff]
        %v397 = vld [vmem:[#allocation7 + $0x40] sm:$0xff]
        %v398 = vld [vmem:[#allocation7 + $0x48] sm:$0xff]
        %v399 = vld [vmem:[#allocation7 + $0x50] sm:$0xff]
        %v400 = vld [vmem:[#allocation7 + $0x58] sm:$0xff]
        %v401 = vld [vmem:[#allocation7 + $0x60] sm:$0xff]
        %v402 = vld [vmem:[#allocation7 + $0x68] sm:$0xff]
        %v403 = vld [vmem:[#allocation7 + $0x70] sm:$0xff]
        %v404 = vld [vmem:[#allocation7 + $0x78] sm:$0xff]
        %vm405 = vcmask 261120
        %v407 = vsel %vm405, %v388, 0
        %409 = vmatprep.subr.mxu0 0.0
        %410 = vmatpush1.msra.mxu0 0.0
        %411 = vmatprep.subr.mxu0 0.0
        %412 = vmatpush1.msra.mxu0 0.0
        %413 = vmatprep.subr.mxu0 0.0
        %414 = vmatpush1.msra.mxu0 0.0
        %415 = vmatprep.subr.mxu0 0.0
        %416 = vmatpush1.msra.mxu0 0.0
        %417 = vmatprep.subr.mxu0 0.0
        %418 = vmatpush1.msra.mxu0 0.0
        %419 = vmatprep.subr.mxu0 0.0
        %420 = vmatpush1.msra.mxu0 0.0
        %421 = vmatprep.subr.mxu0 0.0
        %422 = vmatpush1.msra.mxu0 0.0
        %423 = vmatprep.subr.mxu0 0.0
        %424 = vmatpush1.msra.mxu0 0.0
        %425 = vmatprep.subr.mxu0 0.0
        %426 = vmatpush1.msra.mxu0 0.0
        %427 = vmatprep.subr.mxu0 0.0
        %428 = vmatpush1.msra.mxu0 0.0
        %429 = vmatprep.subr.mxu0 0.0
        %430 = vmatpush1.msra.mxu0 0.0
        %431 = vmatprep.subr.mxu0 0.0
        %432 = vmatpush1.msra.mxu0 0.0
        %433 = vmatprep.subr.mxu0 %v402
        %434 = vmatpush1.msra.mxu0 %v401
        %435 = vmatprep.subr.mxu0 %v398
        %436 = vmatpush1.msra.mxu0 %v397
        %437 = vmatprep.subr.mxu0 %v394
        %438 = vmatpush1.msra.mxu0 %v393
        %439 = vmatprep.subr.mxu0 %v390
        %440 = vmatpush1.msra.mxu0 %v389
        %441 = vmatprep.subr.mxu0 0.0
        %442 = vmatpush2.msra.mxu0 0.0
        %443 = vmatprep.subr.mxu0 0.0
        %444 = vmatpush2.msra.mxu0 0.0
        %445 = vmatprep.subr.mxu0 0.0
        %446 = vmatpush2.msra.mxu0 0.0
        %447 = vmatprep.subr.mxu0 0.0
        %448 = vmatpush2.msra.mxu0 0.0
        %449 = vmatprep.subr.mxu0 0.0
        %450 = vmatpush2.msra.mxu0 0.0
        %451 = vmatprep.subr.mxu0 0.0
        %452 = vmatpush2.msra.mxu0 0.0
        %453 = vmatprep.subr.mxu0 0.0
        %454 = vmatpush2.msra.mxu0 0.0
        %455 = vmatprep.subr.mxu0 0.0
        %456 = vmatpush2.msra.mxu0 0.0
        %457 = vmatprep.subr.mxu0 0.0
        %458 = vmatpush2.msra.mxu0 0.0
        %459 = vmatprep.subr.mxu0 0.0
        %460 = vmatpush2.msra.mxu0 0.0
        %461 = vmatprep.subr.mxu0 0.0
        %462 = vmatpush2.msra.mxu0 0.0
        %463 = vmatprep.subr.mxu0 0.0
        %464 = vmatpush2.msra.mxu0 0.0
        %465 = vmatprep.subr.mxu0 0.0
        %466 = vmatpush2.msra.mxu0 0.0
        %467 = vmatprep.subr.mxu0 0.0
        %468 = vmatpush2.msra.mxu0 0.0
        %469 = vmatprep.subr.mxu0 0.0
        %470 = vmatpush2.msra.mxu0 0.0
        %471 = vmatprep.subr.mxu0 0.0
        %472 = vmatpush2.msra.mxu0 0.0
        %473 = vmatprep.mubr.f32.mxu0 0.0
        %474 = vmatmul.mubr.f32.gmra.mxu0 %v407
        %v475 = vpop.f32.mrf.mxu0
        %v476 = vadd.f32 0.0, %v475
        %v477 = vpop.f32.mrf.mxu0
        %v478 = vadd.f32 0.0, %v477
        %479 = vdwg.mxu0
        %480 = vmatprep.subr.mxu0 0.0
        %481 = vmatpush1.msra.mxu0 0.0
        %482 = vmatprep.subr.mxu0 0.0
        %483 = vmatpush1.msra.mxu0 0.0
        %484 = vmatprep.subr.mxu0 0.0
        %485 = vmatpush1.msra.mxu0 0.0
        %486 = vmatprep.subr.mxu0 0.0
        %487 = vmatpush1.msra.mxu0 0.0
        %488 = vmatprep.subr.mxu0 0.0
        %489 = vmatpush1.msra.mxu0 0.0
        %490 = vmatprep.subr.mxu0 0.0
        %491 = vmatpush1.msra.mxu0 0.0
        %492 = vmatprep.subr.mxu0 0.0
        %493 = vmatpush1.msra.mxu0 0.0
        %494 = vmatprep.subr.mxu0 0.0
        %495 = vmatpush1.msra.mxu0 0.0
        %496 = vmatprep.subr.mxu0 0.0
        %497 = vmatpush1.msra.mxu0 0.0
        %498 = vmatprep.subr.mxu0 0.0
        %499 = vmatpush1.msra.mxu0 0.0
        %500 = vmatprep.subr.mxu0 0.0
        %501 = vmatpush1.msra.mxu0 0.0
        %502 = vmatprep.subr.mxu0 0.0
        %503 = vmatpush1.msra.mxu0 0.0
        %504 = vmatprep.subr.mxu0 %v404
        %505 = vmatpush1.msra.mxu0 %v403
        %506 = vmatprep.subr.mxu0 %v400
        %507 = vmatpush1.msra.mxu0 %v399
        %508 = vmatprep.subr.mxu0 %v396
        %509 = vmatpush1.msra.mxu0 %v395
        %510 = vmatprep.subr.mxu0 %v392
        %511 = vmatpush1.msra.mxu0 %v391
        %512 = vmatprep.subr.mxu0 0.0
        %513 = vmatpush2.msra.mxu0 0.0
        %514 = vmatprep.subr.mxu0 0.0
        %515 = vmatpush2.msra.mxu0 0.0
        %516 = vmatprep.subr.mxu0 0.0
        %517 = vmatpush2.msra.mxu0 0.0
        %518 = vmatprep.subr.mxu0 0.0
        %519 = vmatpush2.msra.mxu0 0.0
        %520 = vmatprep.subr.mxu0 0.0
        %521 = vmatpush2.msra.mxu0 0.0
        %522 = vmatprep.subr.mxu0 0.0
        %523 = vmatpush2.msra.mxu0 0.0
        %524 = vmatprep.subr.mxu0 0.0
        %525 = vmatpush2.msra.mxu0 0.0
        %526 = vmatprep.subr.mxu0 0.0
        %527 = vmatpush2.msra.mxu0 0.0
        %528 = vmatprep.subr.mxu0 0.0
        %529 = vmatpush2.msra.mxu0 0.0
        %530 = vmatprep.subr.mxu0 0.0
        %531 = vmatpush2.msra.mxu0 0.0
        %532 = vmatprep.subr.mxu0 0.0
        %533 = vmatpush2.msra.mxu0 0.0
        %534 = vmatprep.subr.mxu0 0.0
        %535 = vmatpush2.msra.mxu0 0.0
        %536 = vmatprep.subr.mxu0 0.0
        %537 = vmatpush2.msra.mxu0 0.0
        %538 = vmatprep.subr.mxu0 0.0
        %539 = vmatpush2.msra.mxu0 0.0
        %540 = vmatprep.subr.mxu0 0.0
        %541 = vmatpush2.msra.mxu0 0.0
        %542 = vmatprep.subr.mxu0 0.0
        %543 = vmatpush2.msra.mxu0 0.0
        %544 = vmatprep.mubr.f32.mxu0 0.0
        %545 = vmatmul.mubr.f32.gmra.mxu0 %v407
        %v546 = vpop.f32.mrf.mxu0
        %v547 = vadd.f32 0.0, %v546
        %v548 = vpop.f32.mrf.mxu0
        %v549 = vadd.f32 0.0, %v548
        %550 = vdwg.mxu0
        %v551 = vld [vmem:[%s3] sm:$0x1]
        %v553 = vlaneseq
        %v554 = vshrl.u32 %v553, 7
        %v555 = vsub.s32 0, %v554
        %v556 = vrot.slane %v551, %v555
        %v558 = vadd.f32 %v549, %v556
        %v559 = vsub.f32 0.0, %v547
        %v560 = vmul.f32 %v559, 1.442695
        %v561 = vpow.pop %v560
        %v562 = vadd.f32 %v561, 1.0
        %v563 = vrcp.pop %v562
        %v564 = vmul.f32 1.0, %v563
        %vm565 = vcmask 31744
        %v566 = vsel %vm565, %v558, -inf
        %567 = vmax.xlane.f32.xlu0 %v566
        %v568 = vpop.xlane.xlu0 %567
        %v569 = vsub.f32 %v558, %v568
        %v570 = vmul.f32 %v569, 1.442695
        %v571 = vpow.pop %v570
        %v572 = vsel %vm565, %v571, 0.0
        %573 = vadd.xlane.f32.xlu0 %v572
        %v574 = vpop.xlane.xlu0 %573
        %v575 = vrcp.pop %v574
        %v576 = vmul.f32 %v571, %v575
        %v577 = vld [vmem:[%s339] sm:$0xf]
        %v578 = vld [vmem:[%s5] sm:$0xf]
        %v579 = vmul.f32 %v577, %v578
        %v580 = vmul.f32 %v478, %v476
        %582 = vset.pattern.permute.xlu0 0
        %583 = vperm.xlu0 %582, %v576
        %v584 = vpop.permute.xlu0 %583
        %v586 = vlaneseq
        %v587 = vshrl.u32 %v586, 7
        %v588 = vsub.s32 0, %v587
        %v589 = vrot.slane %v579, %v588
        %v590 = vmul.f32 %v584, %v589
        %v591 = vadd.f32 %v580, %v590
        %592 = vset.pattern.permute.xlu0 1
        %593 = vperm.xlu0 %592, %v576
        %v594 = vpop.permute.xlu0 %593
        %v596 = vlaneseq
        %v597 = vshrl.u32 %v596, 7
        %v598 = vsub.s32 1, %v597
        %v599 = vrot.slane %v579, %v598
        %v600 = vmul.f32 %v594, %v599
        %v601 = vadd.f32 %v591, %v600
        %602 = vset.pattern.permute.xlu0 2
        %603 = vperm.xlu0 %602, %v576
        %v604 = vpop.permute.xlu0 %603
        %v606 = vlaneseq
        %v607 = vshrl.u32 %v606, 7
        %v608 = vsub.s32 2, %v607
        %v609 = vrot.slane %v579, %v608
        %v610 = vmul.f32 %v604, %v609
        %v611 = vadd.f32 %v601, %v610
        %612 = vset.pattern.permute.xlu0 3
        %613 = vperm.xlu0 %612, %v576
        %v614 = vpop.permute.xlu0 %613
        %v616 = vlaneseq
        %v617 = vshrl.u32 %v616, 7
        %v618 = vsub.s32 3, %v617
        %v619 = vrot.slane %v579, %v618
        %v620 = vmul.f32 %v614, %v619
        %v621 = vadd.f32 %v611, %v620
        %v622 = vmul.f32 %v564, %v621
        %v623 = vld [vmem:[#allocation8] sm:$0xff]
        %v624 = vld [vmem:[#allocation8 + $0x8] sm:$0xff]
        %v625 = vld [vmem:[#allocation8 + $0x10] sm:$0xff]
        %v626 = vld [vmem:[#allocation8 + $0x18] sm:$0xff]
        %v628 = vsel %vm405, %v622, 0
        %630 = vmatprep.subr.mxu0 0.0
        %631 = vmatpush1.msra.mxu0 0.0
        %632 = vmatprep.subr.mxu0 0.0
        %633 = vmatpush1.msra.mxu0 0.0
        %634 = vmatprep.subr.mxu0 0.0
        %635 = vmatpush1.msra.mxu0 0.0
        %636 = vmatprep.subr.mxu0 0.0
        %637 = vmatpush1.msra.mxu0 0.0
        %638 = vmatprep.subr.mxu0 0.0
        %639 = vmatpush1.msra.mxu0 0.0
        %640 = vmatprep.subr.mxu0 0.0
        %641 = vmatpush1.msra.mxu0 0.0
        %642 = vmatprep.subr.mxu0 0.0
        %643 = vmatpush1.msra.mxu0 0.0
        %644 = vmatprep.subr.mxu0 0.0
        %645 = vmatpush1.msra.mxu0 0.0
        %646 = vmatprep.subr.mxu0 0.0
        %647 = vmatpush1.msra.mxu0 0.0
        %648 = vmatprep.subr.mxu0 0.0
        %649 = vmatpush1.msra.mxu0 0.0
        %650 = vmatprep.subr.mxu0 0.0
        %651 = vmatpush1.msra.mxu0 0.0
        %652 = vmatprep.subr.mxu0 0.0
        %653 = vmatpush1.msra.mxu0 0.0
        %654 = vmatprep.subr.mxu0 0.0
        %655 = vmatpush1.msra.mxu0 %v626
        %656 = vmatprep.subr.mxu0 0.0
        %657 = vmatpush1.msra.mxu0 %v625
        %658 = vmatprep.subr.mxu0 0.0
        %659 = vmatpush1.msra.mxu0 %v624
        %660 = vmatprep.subr.mxu0 0.0
        %661 = vmatpush1.msra.mxu0 %v623
        %662 = vmatprep.subr.mxu0 0.0
        %663 = vmatpush2.msra.mxu0 0.0
        %664 = vmatprep.subr.mxu0 0.0
        %665 = vmatpush2.msra.mxu0 0.0
        %666 = vmatprep.subr.mxu0 0.0
        %667 = vmatpush2.msra.mxu0 0.0
        %668 = vmatprep.subr.mxu0 0.0
        %669 = vmatpush2.msra.mxu0 0.0
        %670 = vmatprep.subr.mxu0 0.0
        %671 = vmatpush2.msra.mxu0 0.0
        %672 = vmatprep.subr.mxu0 0.0
        %673 = vmatpush2.msra.mxu0 0.0
        %674 = vmatprep.subr.mxu0 0.0
        %675 = vmatpush2.msra.mxu0 0.0
        %676 = vmatprep.subr.mxu0 0.0
        %677 = vmatpush2.msra.mxu0 0.0
        %678 = vmatprep.subr.mxu0 0.0
        %679 = vmatpush2.msra.mxu0 0.0
        %680 = vmatprep.subr.mxu0 0.0
        %681 = vmatpush2.msra.mxu0 0.0
        %682 = vmatprep.subr.mxu0 0.0
        %683 = vmatpush2.msra.mxu0 0.0
        %684 = vmatprep.subr.mxu0 0.0
        %685 = vmatpush2.msra.mxu0 0.0
        %686 = vmatprep.subr.mxu0 0.0
        %687 = vmatpush2.msra.mxu0 0.0
        %688 = vmatprep.subr.mxu0 0.0
        %689 = vmatpush2.msra.mxu0 0.0
        %690 = vmatprep.subr.mxu0 0.0
        %691 = vmatpush2.msra.mxu0 0.0
        %692 = vmatprep.subr.mxu0 0.0
        %693 = vmatpush2.msra.mxu0 0.0
        %694 = vmatprep.mubr.f32.mxu0 0.0
        %695 = vmatmul.mubr.f32.gmra.mxu0 %v628
        %v696 = vpop.f32.mrf.mxu0
        %v697 = vadd.f32 0.0, %v696
        %v698 = vpop.f32.mrf.mxu0
        %699 = vdwg.mxu0
        %700 = vst.msk [vmem:[%s380] sm:$0xff] %vm405, %v697
        %p701 = scmp.eq.s32.totalorder %s37, 0
        // Predicated region
        $region61: #{tpu_custom_call.1} parent=43 // pred_check
          %p702 = pneg %p701
        $region62: #{tpu_custom_call.1} parent=43 // pred_check_branch
          %704 = sbr.rel (%p702) target = $region64
        $region63: #{tpu_custom_call.1} parent=43 // pred_region
          %v705 = vlaneseq
          %v706 = vshrl.u32 %v705, 7
          %v707 = vsub.s32 7, %v706
          %v708 = vrot.slane %v580, %v707
          %v709 = vadd.f32 %v579, %v708
          %vm710 = vcmask 257024
          %711 = vst.msk [vmem:[%s387] sm:$0xf] %vm710, %v709
        $region64: #{tpu_custom_call.1} parent=43 // pred_fallthru
          _
        %s712 = sand.u32 %s192, 1
        %s713 = scalar_lea.sflag [#allocation4], %s712
        %s714 = sand.u32 %s192, 1
        %s715 = smul.addr %s714, 8
        %s716 = scalar_lea.vmem [#allocation10], %s715
        %s717 = sand.u32 %s218, 1
        %s718 = scalar_lea.sflag [#allocation12], %s717
        %s719 = sand.u32 %s218, 1
        %s720 = smul.addr %s719, 4
        %s721 = scalar_lea.vmem [#allocation11], %s720
        // Predicated region
        $region65: #{tpu_custom_call.1} parent=43 // pred_check
          %p722 = pneg %p202
        $region66: #{tpu_custom_call.1} parent=43 // pred_check_branch
          %724 = sbr.rel (%p722) target = $region68
        $region67: #{tpu_custom_call.1} parent=43 // pred_region
          %s726 = ssub.s32 128, 128
          %727 = vsyncadd %s713, %s726
          %s728 = sadd.s32 %s37, %s36
          %s729 = smul.addr %s728, 128
          %s730 = scalar_lea.hbm %s6, %s729
          %s732 = sshll.u32 %s716, 4
          %s733 = int_to_ptr.vmem [resolvable:$true] %s732
          %735 = dma.vmem_to_hbm [thread:$0]  %s733, 128, %s730, %s713
        $region68: #{tpu_custom_call.1} parent=43 // pred_fallthru
          _
        // Predicated region
        $region69: #{tpu_custom_call.1} parent=43 // pred_check
          %p736 = pneg %p228
        $region70: #{tpu_custom_call.1} parent=43 // pred_check_branch
          %738 = sbr.rel (%p736) target = $region72
        $region71: #{tpu_custom_call.1} parent=43 // pred_region
          %s740 = ssub.s32 64, 64
          %741 = vsyncadd %s718, %s740
          %s742 = smul.addr %s36, 64
          %s743 = scalar_lea.hbm %s7, %s742
          %s745 = sshll.u32 %s721, 4
          %s746 = int_to_ptr.vmem [resolvable:$true] %s745
          %748 = dma.vmem_to_hbm [thread:$0]  %s746, 64, %s743, %s718
        $region72: #{tpu_custom_call.1} parent=43 // pred_fallthru
          _
      $region44: #{tpu_custom_call.1} parent=5 // pred_fallthru
        _
      %p749 = scmp.le.s32.totalorder 2, %s27
      // Predicated region
      $region73: #{tpu_custom_call.1} parent=5 // pred_check
        %p750 = pneg %p749
      $region74: #{tpu_custom_call.1} parent=5 // pred_check_branch
        %752 = sbr.rel (%p750) target = $region76
      $region75: #{tpu_custom_call.1} parent=5 // pred_region
        %s753 = ssub.s32 %s27, 2
        // Predicated region
        $region77: #{tpu_custom_call.1} parent=75 // pred_check
          %p754 = pneg %p208
        $region78: #{tpu_custom_call.1} parent=75 // pred_check_branch
          %756 = sbr.rel (%p754) target = $region80
        $region79: #{tpu_custom_call.1} parent=75 // pred_region
          %s757 = sand.u32 %s193, 1
          %s758 = scalar_lea.sflag [#allocation4], %s757
          %s759 = sand.u32 %s193, 1
          %s760 = smul.addr %s759, 8
          %s761 = scalar_lea.vmem [#allocation10], %s760
          %762 = dma.done %s758, 128
        $region80: #{tpu_custom_call.1} parent=75 // pred_fallthru
          _
        // Predicated region
        $region81: #{tpu_custom_call.1} parent=75 // pred_check
          %p763 = pneg %p234
        $region82: #{tpu_custom_call.1} parent=75 // pred_check_branch
          %765 = sbr.rel (%p763) target = $region84
        $region83: #{tpu_custom_call.1} parent=75 // pred_region
          %s766 = sand.u32 %s219, 1
          %s767 = scalar_lea.sflag [#allocation12], %s766
          %s768 = sand.u32 %s219, 1
          %s769 = smul.addr %s768, 4
          %s770 = scalar_lea.vmem [#allocation11], %s769
          %771 = dma.done %s767, 64
        $region84: #{tpu_custom_call.1} parent=75 // pred_fallthru
          _
      $region76: #{tpu_custom_call.1} parent=5 // pred_fallthru
        _
    $region6: #{tpu_custom_call.1} parent=1 // loop_footer
      %s31 = sadd.s32 1, %s27
    $region7: #{tpu_custom_call.1} parent=1 // loop_footer_branch
      %26 = sbr.rel target = $region3
    $region8: #{tpu_custom_call.1} parent=1 // loop_exit
      _
    %772 = vsyncpa [#allocation3], 1
    %s773 = scalar_lea.sflag [#allocation3], 1
    %774 = vsyncpa %s773, 1
    %775 = vsyncpa [#allocation6], 1
    %s776 = scalar_lea.sflag [#allocation6], 1
    %777 = vsyncpa %s776, 1
    %778 = vsyncpa [#allocation9], 1
    %779 = vsyncpa [#allocation4], 1
    %s780 = scalar_lea.sflag [#allocation4], 1
    %781 = vsyncpa %s780, 1
    %782 = vsyncpa [#allocation12], 1
    %s783 = scalar_lea.sflag [#allocation12], 1
    %784 = vsyncpa %s783, 1

// kernel: tpu_custom_call.1
$region0: #{tpu_custom_call.1}
  #allocation0 [shape = 'u32[]', space=smem, size = 0x4, offset = 0x4, fixed_abs, tag = 'smem constant byte address 0x4 - core index']
  #allocation1 [shape = 'u32[144,128]{1,0:T(1,128)}', space=vmem, size = 0x12000, scoped, tag = 'internal scratch']
  %s0 = inlined_call_operand.hbm [shape: f32[2,8,32], index: 0, kind: input, shape index: {}]
  %s1 = inlined_call_operand.hbm [shape: f32[2,4,32], index: 1, kind: input, shape index: {}]
  %s2 = inlined_call_operand.hbm [shape: f32[32,512], index: 2, kind: input, shape index: {}]
  %s3 = inlined_call_operand.vmem [shape: f32[1,4], index: 3, kind: input, shape index: {}]
  %s4 = inlined_call_operand.hbm [shape: f32[32,32], index: 4, kind: input, shape index: {}]
  %s5 = inlined_call_operand.vmem [shape: f32[4,32], index: 5, kind: input, shape index: {}]
  %s6 = inlined_call_operand.hbm [shape: f32[2,8,32], index: 6, kind: output, shape index: {0}]
  %s7 = inlined_call_operand.hbm [shape: f32[2,4,32], index: 7, kind: output, shape index: {1}]
  %8 = xla_tuple %s6, %s7
  %s9 = sld [smem:[#allocation0]]
  $region85: #{tpu_custom_call.1} parent=0
    _
  %s11 = ssub.s32 1, %s9
  %s12 = scalar_select 0, %s11, %s9
  $region1: #{tpu_custom_call.1} parent=0
    #allocation2 [shape = 'u8[8192]{0}', space=vmem, size = 0x2000, scoped, tag = 'input window, operand 0']
    #allocation3 [shape = 's32[2]{0}', space=sflag, size = 0x8, scoped, tag = 'scoped memory for tpu_custom_call.1']
    #allocation4 [shape = 's32[2]{0}', space=sflag, size = 0x8, scoped, tag = 'scoped memory for tpu_custom_call.1']
    #allocation5 [shape = 'u8[4096]{0}', space=vmem, size = 0x1000, scoped, tag = 'input window, operand 1']
    #allocation6 [shape = 's32[2]{0}', space=sflag, size = 0x8, scoped, tag = 'scoped memory for tpu_custom_call.1']
    #allocation7 [shape = 'u8[65536]{0}', space=vmem, size = 0x10000, scoped, tag = 'input window, operand 2, single buffered']
    #allocation8 [shape = 'u8[16384]{0}', space=vmem, size = 0x4000, scoped, tag = 'input window, operand 4, single buffered']
    #allocation9 [shape = 's32[1]{0}', space=sflag, size = 0x4, scoped, tag = 'scoped memory for tpu_custom_call.1']
    #allocation10 [shape = 'u8[8192]{0}', space=vmem, size = 0x2000, scoped, tag = 'output window, operand 0']
    #allocation11 [shape = 'u8[4096]{0}', space=vmem, size = 0x1000, scoped, tag = 'output window, operand 1']
    #allocation12 [shape = 's32[2]{0}', space=sflag, size = 0x8, scoped, tag = 'scoped memory for tpu_custom_call.1']
    %13 = vsyncpa [#allocation3], 0
    %s14 = scalar_lea.sflag [#allocation3], 1
    %15 = vsyncpa %s14, 0
    %16 = vsyncpa [#allocation6], 0
    %s17 = scalar_lea.sflag [#allocation6], 1
    %18 = vsyncpa %s17, 0
    %19 = vsyncpa [#allocation9], 0
    %20 = vsyncpa [#allocation4], 0
    %s21 = scalar_lea.sflag [#allocation4], 1
    %22 = vsyncpa %s21, 0
    %23 = vsyncpa [#allocation12], 0
    %s24 = scalar_lea.sflag [#allocation12], 1
    %25 = vsyncpa %s24, 0
    loop: start=0, step=1, limit=4
    $region2: #{tpu_custom_call.1} parent=1 // loop_pre_header
      _
    $region3: #{tpu_custom_call.1} parent=1 // loop_header
      %s27 = sphi 0, %s31
      %p28 = scmp.ge.s32.totalorder %s27, 4
      %s34 = sphi 0, %s46
      %s35 = sphi 0, %s42
      %s36 = sphi 0, %s34
      %s37 = sphi 0, %s35
      %s38 = sphi 0, %s36
      %s39 = sphi 0, %s37
      %s51 = sphi 0, %s53
      %s54 = sphi 0, %s51
      %s55 = sphi 0, %s54
      %s71 = sphi 0, %s55
      %s77 = sphi 0, %s79
      %s80 = sphi 0, %s77
      %s81 = sphi 0, %s80
      %s97 = sphi 0, %s81
      %s101 = sphi 0, %s101
      %s103 = sphi 0, %s101
      %s104 = sphi 0, %s103
      %s118 = sphi 0, %s104
      %s122 = sphi 0, %s122
      %s124 = sphi 0, %s122
      %s125 = sphi 0, %s124
      %s139 = sphi 0, %s125
      %s143 = sphi 0, %s143
      %s145 = sphi 0, %s143
      %s146 = sphi 0, %s145
      %s160 = sphi 0, %s146
      %s164 = sphi 0, %s164
      %s166 = sphi 0, %s164
      %s167 = sphi 0, %s166
      %s181 = sphi 0, %s167
      %s189 = sphi 0, %s191
      %s192 = sphi 0, %s189
      %s193 = sphi 0, %s192
      %s209 = sphi 0, %s193
      %s215 = sphi 0, %s217
      %s218 = sphi 0, %s215
      %s219 = sphi 0, %s218
      %s235 = sphi 0, %s219
    $region4: #{tpu_custom_call.1} parent=1 // loop_header_branch
      %30 = sbr.rel (%p28) target = $region8
    $region5: #{tpu_custom_call.1} parent=1 // loop_body
      %s32 = ssub.s32 %s27, 1
      %s33 = ssub.s32 %s27, 2
      %s40 = sadd.s32 1, %s35
      %p41 = scmp.ge.s32.totalorder %s40, 1
      %s42 = scalar_select %p41, 0, %s40
      %s43 = sadd.s32 1, %s34
      %s44 = scalar_select %p41, %s43, %s34
      %p45 = scmp.ge.s32.totalorder %s44, 2
      %s46 = scalar_select %p45, 0, %s44
      %s47 = ssub.s32 %s34, %s46
      %s48 = ssub.s32 %s35, %s42
      %s49 = sor.u32 %s47, %s48
      %p50 = scmp.eq.s32.totalorder %s49, 0
      %s52 = sadd.s32 %s51, 1
      %s53 = scalar_select %p50, %s51, %s52
      %p56 = pneg %p50
      %p57 = scmp.eq.s32.totalorder %s27, 1
      %p58 = por %p56, %p57
      %p59 = scmp.ne.s32.totalorder %s51, %s54
      %p60 = scmp.eq.s32.totalorder %s27, 0
      %p61 = por %p59, %p60
      %p62 = scmp.ne.s32.totalorder %s51, %s54
      %p63 = scmp.eq.s32.totalorder %s32, 1
      %p64 = por %p62, %p63
      %p65 = scmp.ne.s32.totalorder %s54, %s55
      %p66 = scmp.eq.s32.totalorder %s32, 0
      %p67 = por %p65, %p66
      %p68 = scmp.ne.s32.totalorder %s54, %s55
      %p69 = scmp.eq.s32.totalorder %s33, 1
      %p70 = por %p68, %p69
      %p72 = scmp.ne.s32.totalorder %s55, %s71
      %p73 = scmp.eq.s32.totalorder %s33, 0
      %p74 = por %p72, %p73
      %s75 = ssub.s32 %s34, %s46
      %p76 = scmp.eq.s32.totalorder %s75, 0
      %s78 = sadd.s32 %s77, 1
      %s79 = scalar_select %p76, %s77, %s78
      %p82 = pneg %p76
      %p83 = scmp.eq.s32.totalorder %s27, 1
      %p84 = por %p82, %p83
      %p85 = scmp.ne.s32.totalorder %s77, %s80
      %p86 = scmp.eq.s32.totalorder %s27, 0
      %p87 = por %p85, %p86
      %p88 = scmp.ne.s32.totalorder %s77, %s80
      %p89 = scmp.eq.s32.totalorder %s32, 1
      %p90 = por %p88, %p89
      %p91 = scmp.ne.s32.totalorder %s80, %s81
      %p92 = scmp.eq.s32.totalorder %s32, 0
      %p93 = por %p91, %p92
      %p94 = scmp.ne.s32.totalorder %s80, %s81
      %p95 = scmp.eq.s32.totalorder %s33, 1
      %p96 = por %p94, %p95
      %p98 = scmp.ne.s32.totalorder %s81, %s97
      %p99 = scmp.eq.s32.totalorder %s33, 0
      %p100 = por %p98, %p99
      %s102 = sadd.s32 %s101, 1
      %p105 = scmp.eq.s32.totalorder %s27, 1
      %p106 = scmp.ne.s32.totalorder %s101, %s103
      %p107 = scmp.eq.s32.totalorder %s27, 0
      %p108 = por %p106, %p107
      %p109 = scmp.ne.s32.totalorder %s101, %s103
      %p110 = scmp.eq.s32.totalorder %s32, 1
      %p111 = por %p109, %p110
      %p112 = scmp.ne.s32.totalorder %s103, %s104
      %p113 = scmp.eq.s32.totalorder %s32, 0
      %p114 = por %p112, %p113
      %p115 = scmp.ne.s32.totalorder %s103, %s104
      %p116 = scmp.eq.s32.totalorder %s33, 1
      %p117 = por %p115, %p116
      %p119 = scmp.ne.s32.totalorder %s104, %s118
      %p120 = scmp.eq.s32.totalorder %s33, 0
      %p121 = por %p119, %p120
      %s123 = sadd.s32 %s122, 1
      %p126 = scmp.eq.s32.totalorder %s27, 1
      %p127 = scmp.ne.s32.totalorder %s122, %s124
      %p128 = scmp.eq.s32.totalorder %s27, 0
      %p129 = por %p127, %p128
      %p130 = scmp.ne.s32.totalorder %s122, %s124
      %p131 = scmp.eq.s32.totalorder %s32, 1
      %p132 = por %p130, %p131
      %p133 = scmp.ne.s32.totalorder %s124, %s125
      %p134 = scmp.eq.s32.totalorder %s32, 0
      %p135 = por %p133, %p134
      %p136 = scmp.ne.s32.totalorder %s124, %s125
      %p137 = scmp.eq.s32.totalorder %s33, 1
      %p138 = por %p136, %p137
      %p140 = scmp.ne.s32.totalorder %s125, %s139
      %p141 = scmp.eq.s32.totalorder %s33, 0
      %p142 = por %p140, %p141
      %s144 = sadd.s32 %s143, 1
      %p147 = scmp.eq.s32.totalorder %s27, 1
      %p148 = scmp.ne.s32.totalorder %s143, %s145
      %p149 = scmp.eq.s32.totalorder %s27, 0
      %p150 = por %p148, %p149
      %p151 = scmp.ne.s32.totalorder %s143, %s145
      %p152 = scmp.eq.s32.totalorder %s32, 1
      %p153 = por %p151, %p152
      %p154 = scmp.ne.s32.totalorder %s145, %s146
      %p155 = scmp.eq.s32.totalorder %s32, 0
      %p156 = por %p154, %p155
      %p157 = scmp.ne.s32.totalorder %s145, %s146
      %p158 = scmp.eq.s32.totalorder %s33, 1
      %p159 = por %p157, %p158
      %p161 = scmp.ne.s32.totalorder %s146, %s160
      %p162 = scmp.eq.s32.totalorder %s33, 0
      %p163 = por %p161, %p162
      %s165 = sadd.s32 %s164, 1
      %p168 = scmp.eq.s32.totalorder %s27, 1
      %p169 = scmp.ne.s32.totalorder %s164, %s166
      %p170 = scmp.eq.s32.totalorder %s27, 0
      %p171 = por %p169, %p170
      %p172 = scmp.ne.s32.totalorder %s164, %s166
      %p173 = scmp.eq.s32.totalorder %s32, 1
      %p174 = por %p172, %p173
      %p175 = scmp.ne.s32.totalorder %s166, %s167
      %p176 = scmp.eq.s32.totalorder %s32, 0
      %p177 = por %p175, %p176
      %p178 = scmp.ne.s32.totalorder %s166, %s167
      %p179 = scmp.eq.s32.totalorder %s33, 1
      %p180 = por %p178, %p179
      %p182 = scmp.ne.s32.totalorder %s167, %s181
      %p183 = scmp.eq.s32.totalorder %s33, 0
      %p184 = por %p182, %p183
      %s185 = ssub.s32 %s34, %s46
      %s186 = ssub.s32 %s35, %s42
      %s187 = sor.u32 %s185, %s186
      %p188 = scmp.eq.s32.totalorder %s187, 0
      %s190 = sadd.s32 %s189, 1
      %s191 = scalar_select %p188, %s189, %s190
      %p194 = pneg %p188
      %p195 = scmp.eq.s32.totalorder %s27, 1
      %p196 = por %p194, %p195
      %p197 = scmp.ne.s32.totalorder %s189, %s192
      %p198 = scmp.eq.s32.totalorder %s27, 0
      %p199 = por %p197, %p198
      %p200 = scmp.ne.s32.totalorder %s189, %s192
      %p201 = scmp.eq.s32.totalorder %s32, 1
      %p202 = por %p200, %p201
      %p203 = scmp.ne.s32.totalorder %s192, %s193
      %p204 = scmp.eq.s32.totalorder %s32, 0
      %p205 = por %p203, %p204
      %p206 = scmp.ne.s32.totalorder %s192, %s193
      %p207 = scmp.eq.s32.totalorder %s33, 1
      %p208 = por %p206, %p207
      %p210 = scmp.ne.s32.totalorder %s193, %s209
      %p211 = scmp.eq.s32.totalorder %s33, 0
      %p212 = por %p210, %p211
      %s213 = ssub.s32 %s34, %s46
      %p214 = scmp.eq.s32.totalorder %s213, 0
      %s216 = sadd.s32 %s215, 1
      %s217 = scalar_select %p214, %s215, %s216
      %p220 = pneg %p214
      %p221 = scmp.eq.s32.totalorder %s27, 1
      %p222 = por %p220, %p221
      %p223 = scmp.ne.s32.totalorder %s215, %s218
      %p224 = scmp.eq.s32.totalorder %s27, 0
      %p225 = por %p223, %p224
      %p226 = scmp.ne.s32.totalorder %s215, %s218
      %p227 = scmp.eq.s32.totalorder %s32, 1
      %p228 = por %p226, %p227
      %p229 = scmp.ne.s32.totalorder %s218, %s219
      %p230 = scmp.eq.s32.totalorder %s32, 0
      %p231 = por %p229, %p230
      %p232 = scmp.ne.s32.totalorder %s218, %s219
      %p233 = scmp.eq.s32.totalorder %s33, 1
      %p234 = por %p232, %p233
      %p236 = scmp.ne.s32.totalorder %s219, %s235
      %p237 = scmp.eq.s32.totalorder %s33, 0
      %p238 = por %p236, %p237
      %p239 = scmp.le.s32.totalorder 1, %s27
      %p240 = scmp.lt.s32.totalorder %s27, 3
      %p241 = pnand %p239, %p240
      %p242 = pneg %p241
      // Predicated region
      $region9: #{tpu_custom_call.1} parent=5 // pred_check
        _
      $region10: #{tpu_custom_call.1} parent=5 // pred_check_branch
        %244 = sbr.rel (%p241) target = $region12
      $region11: #{tpu_custom_call.1} parent=5 // pred_region
        %s245 = ssub.s32 %s27, 1
        // Predicated region
        $region13: #{tpu_custom_call.1} parent=11 // pred_check
          %p246 = pneg %p114
        $region14: #{tpu_custom_call.1} parent=11 // pred_check_branch
          %248 = sbr.rel (%p246) target = $region16
        $region15: #{tpu_custom_call.1} parent=11 // pred_region
          %s250 = ssub.s32 2048, 2048
          %251 = vsyncadd [#allocation6], %s250
          %s252 = sshll.u32 [#allocation7], 4
          %s253 = int_to_ptr.vmem [resolvable:$true] %s252
          %258 = dma.hbm_to_vmem [thread:$0]  %s2, 2048, %s253, [#allocation6], 512, 512, 32
        $region16: #{tpu_custom_call.1} parent=11 // pred_fallthru
          _
        // Predicated region
        $region17: #{tpu_custom_call.1} parent=11 // pred_check
          %p259 = pneg %p135
        $region18: #{tpu_custom_call.1} parent=11 // pred_check_branch
          %261 = sbr.rel (%p259) target = $region20
        $region19: #{tpu_custom_call.1} parent=11 // pred_region
          _
        $region20: #{tpu_custom_call.1} parent=11 // pred_fallthru
          _
        // Predicated region
        $region21: #{tpu_custom_call.1} parent=11 // pred_check
          %p262 = pneg %p156
        $region22: #{tpu_custom_call.1} parent=11 // pred_check_branch
          %264 = sbr.rel (%p262) target = $region24
        $region23: #{tpu_custom_call.1} parent=11 // pred_region
          %s266 = ssub.s32 512, 512
          %267 = vsyncadd [#allocation9], %s266
          %s268 = sshll.u32 [#allocation8], 4
          %s269 = int_to_ptr.vmem [resolvable:$true] %s268
          %274 = dma.hbm_to_vmem [thread:$0]  %s4, 512, %s269, [#allocation9], 128, 128, 8
        $region24: #{tpu_custom_call.1} parent=11 // pred_fallthru
          _
        // Predicated region
        $region25: #{tpu_custom_call.1} parent=11 // pred_check
          %p275 = pneg %p177
        $region26: #{tpu_custom_call.1} parent=11 // pred_check_branch
          %277 = sbr.rel (%p275) target = $region28
        $region27: #{tpu_custom_call.1} parent=11 // pred_region
          _
        $region28: #{tpu_custom_call.1} parent=11 // pred_fallthru
          _
      $region12: #{tpu_custom_call.1} parent=5 // pred_fallthru
        _
      %p278 = scmp.lt.s32.totalorder %s27, 2
      // Predicated region
      $region29: #{tpu_custom_call.1} parent=5 // pred_check
        %p279 = pneg %p278
      $region30: #{tpu_custom_call.1} parent=5 // pred_check_branch
        %281 = sbr.rel (%p279) target = $region32
      $region31: #{tpu_custom_call.1} parent=5 // pred_region
        // Predicated region
        $region33: #{tpu_custom_call.1} parent=31 // pred_check
          %p282 = pneg %p61
        $region34: #{tpu_custom_call.1} parent=31 // pred_check_branch
          %284 = sbr.rel (%p282) target = $region36
        $region35: #{tpu_custom_call.1} parent=31 // pred_region
          %s285 = sand.u32 %s51, 1
          %s286 = scalar_lea.sflag [#allocation3], %s285
          %s287 = sand.u32 %s51, 1
          %s288 = smul.addr %s287, 8
          %s289 = scalar_lea.vmem [#allocation2], %s288
          %s291 = ssub.s32 128, 128
          %292 = vsyncadd %s286, %s291
          %s293 = sadd.s32 %s35, %s34
          %s294 = smul.addr %s293, 128
          %s295 = scalar_lea.hbm %s0, %s294
          %s297 = sshll.u32 %s289, 4
          %s298 = int_to_ptr.vmem [resolvable:$true] %s297
          %300 = dma.hbm_to_vmem [thread:$0]  %s295, 128, %s298, %s286
        $region36: #{tpu_custom_call.1} parent=31 // pred_fallthru
          _
        // Predicated region
        $region37: #{tpu_custom_call.1} parent=31 // pred_check
          %p301 = pneg %p87
        $region38: #{tpu_custom_call.1} parent=31 // pred_check_branch
          %303 = sbr.rel (%p301) target = $region40
        $region39: #{tpu_custom_call.1} parent=31 // pred_region
          %s304 = sand.u32 %s27, 1
          %s305 = scalar_lea.sflag [#allocation6], %s304
          %s306 = sand.u32 %s77, 1
          %s307 = smul.addr %s306, 4
          %s308 = scalar_lea.vmem [#allocation5], %s307
          %s310 = ssub.s32 64, 64
          %311 = vsyncadd %s305, %s310
          %s312 = smul.addr %s34, 64
          %s313 = scalar_lea.hbm %s1, %s312
          %s315 = sshll.u32 %s308, 4
          %s316 = int_to_ptr.vmem [resolvable:$true] %s315
          %318 = dma.hbm_to_vmem [thread:$0]  %s313, 64, %s316, %s305
        $region40: #{tpu_custom_call.1} parent=31 // pred_fallthru
          _
      $region32: #{tpu_custom_call.1} parent=5 // pred_fallthru
        _
      %p319 = scmp.le.s32.totalorder 1, %s27
      %p320 = scmp.lt.s32.totalorder %s27, 3
      %p321 = pnand %p319, %p320
      %p322 = pneg %p321
      // Predicated region
      $region41: #{tpu_custom_call.1} parent=5 // pred_check
        _
      $region42: #{tpu_custom_call.1} parent=5 // pred_check_branch
        %324 = sbr.rel (%p321) target = $region44
      $region43: #{tpu_custom_call.1} parent=5 // pred_region
        %s325 = ssub.s32 %s27, 1
        %s326 = sand.u32 %s54, 1
        %s327 = scalar_lea.sflag [#allocation3], %s326
        %s328 = sand.u32 %s54, 1
        %s329 = smul.addr %s328, 8
        %s330 = scalar_lea.vmem [#allocation2], %s329
        // Predicated region
        $region45: #{tpu_custom_call.1} parent=43 // pred_check
          %p331 = pneg %p67
        $region46: #{tpu_custom_call.1} parent=43 // pred_check_branch
          %333 = sbr.rel (%p331) target = $region48
        $region47: #{tpu_custom_call.1} parent=43 // pred_region
          %334 = dma.done %s327, 128
        $region48: #{tpu_custom_call.1} parent=43 // pred_fallthru
          _
        %s335 = sand.u32 %s32, 1
        %s336 = scalar_lea.sflag [#allocation6], %s335
        %s337 = sand.u32 %s80, 1
        %s338 = smul.addr %s337, 4
        %s339 = scalar_lea.vmem [#allocation5], %s338
        // Predicated region
        $region49: #{tpu_custom_call.1} parent=43 // pred_check
          %p340 = pneg %p93
        $region50: #{tpu_custom_call.1} parent=43 // pred_check_branch
          %342 = sbr.rel (%p340) target = $region52
        $region51: #{tpu_custom_call.1} parent=43 // pred_region
          %343 = dma.done %s336, 64
        $region52: #{tpu_custom_call.1} parent=43 // pred_fallthru
          _
        // Predicated region
        $region53: #{tpu_custom_call.1} parent=43 // pred_check
          %p344 = pneg %p114
        $region54: #{tpu_custom_call.1} parent=43 // pred_check_branch
          %346 = sbr.rel (%p344) target = $region56
        $region55: #{tpu_custom_call.1} parent=43 // pred_region
          %347 = dma.done [#allocation6], 2048
        $region56: #{tpu_custom_call.1} parent=43 // pred_fallthru
          _
        // Predicated region
        $region57: #{tpu_custom_call.1} parent=43 // pred_check
          %p348 = pneg %p156
        $region58: #{tpu_custom_call.1} parent=43 // pred_check_branch
          %350 = sbr.rel (%p348) target = $region60
        $region59: #{tpu_custom_call.1} parent=43 // pred_region
          %351 = dma.done [#allocation9], 512
        $region60: #{tpu_custom_call.1} parent=43 // pred_fallthru
          _
        %s352 = sand.u32 %s54, 1
        %s353 = scalar_lea.sflag [#allocation3], %s352
        %s354 = sand.u32 %s54, 1
        %s355 = smul.addr %s354, 8
        %s356 = scalar_lea.vmem [#allocation2], %s355
        %p357 = pneg %p67
        %p358 = pneg %p64
        %s359 = sand.u32 %s32, 1
        %s360 = scalar_lea.sflag [#allocation6], %s359
        %s361 = sand.u32 %s80, 1
        %s362 = smul.addr %s361, 4
        %s363 = scalar_lea.vmem [#allocation5], %s362
        %p364 = pneg %p93
        %p365 = pneg %p90
        %p366 = pneg %p114
        %p367 = pneg %p111
        %p368 = pneg %p135
        %p369 = pneg %p132
        %p370 = pneg %p156
        %p371 = pneg %p153
        %p372 = pneg %p177
        %p373 = pneg %p174
        %p374 = pneg %p205
        %p375 = pneg %p202
        %s376 = sand.u32 %s192, 1
        %s377 = scalar_lea.sflag [#allocation4], %s376
        %s378 = sand.u32 %s192, 1
        %s379 = smul.addr %s378, 8
        %s380 = scalar_lea.vmem [#allocation10], %s379
        %p381 = pneg %p231
        %p382 = pneg %p228
        %s383 = sand.u32 %s218, 1
        %s384 = scalar_lea.sflag [#allocation12], %s383
        %s385 = sand.u32 %s218, 1
        %s386 = smul.addr %s385, 4
        %s387 = scalar_lea.vmem [#allocation11], %s386
        %v388 = vld [vmem:[%s330] sm:$0xff]
        %v389 = vld [vmem:[#allocation7] sm:$0xff]
        %v390 = vld [vmem:[#allocation7 + $0x8] sm:$0xff]
        %v391 = vld [vmem:[#allocation7 + $0x10] sm:$0xff]
        %v392 = vld [vmem:[#allocation7 + $0x18] sm:$0xff]
        %v393 = vld [vmem:[#allocation7 + $0x20] sm:$0xff]
        %v394 = vld [vmem:[#allocation7 + $0x28] sm:$0xff]
        %v395 = vld [vmem:[#allocation7 + $0x30] sm:$0xff]
        %v396 = vld [vmem:[#allocation7 + $0x38] sm:$0xff]
        %v397 = vld [vmem:[#allocation7 + $0x40] sm:$0xff]
        %v398 = vld [vmem:[#allocation7 + $0x48] sm:$0xff]
        %v399 = vld [vmem:[#allocation7 + $0x50] sm:$0xff]
        %v400 = vld [vmem:[#allocation7 + $0x58] sm:$0xff]
        %v401 = vld [vmem:[#allocation7 + $0x60] sm:$0xff]
        %v402 = vld [vmem:[#allocation7 + $0x68] sm:$0xff]
        %v403 = vld [vmem:[#allocation7 + $0x70] sm:$0xff]
        %v404 = vld [vmem:[#allocation7 + $0x78] sm:$0xff]
        %vm405 = vcmask 261120
        %v407 = vsel %vm405, %v388, 0
        %409 = vmatprep.subr.mxu0 0.0
        %410 = vmatpush1.msra.mxu0 0.0
        %411 = vmatprep.subr.mxu0 0.0
        %412 = vmatpush1.msra.mxu0 0.0
        %413 = vmatprep.subr.mxu0 0.0
        %414 = vmatpush1.msra.mxu0 0.0
        %415 = vmatprep.subr.mxu0 0.0
        %416 = vmatpush1.msra.mxu0 0.0
        %417 = vmatprep.subr.mxu0 0.0
        %418 = vmatpush1.msra.mxu0 0.0
        %419 = vmatprep.subr.mxu0 0.0
        %420 = vmatpush1.msra.mxu0 0.0
        %421 = vmatprep.subr.mxu0 0.0
        %422 = vmatpush1.msra.mxu0 0.0
        %423 = vmatprep.subr.mxu0 0.0
        %424 = vmatpush1.msra.mxu0 0.0
        %425 = vmatprep.subr.mxu0 0.0
        %426 = vmatpush1.msra.mxu0 0.0
        %427 = vmatprep.subr.mxu0 0.0
        %428 = vmatpush1.msra.mxu0 0.0
        %429 = vmatprep.subr.mxu0 0.0
        %430 = vmatpush1.msra.mxu0 0.0
        %431 = vmatprep.subr.mxu0 0.0
        %432 = vmatpush1.msra.mxu0 0.0
        %433 = vmatprep.subr.mxu0 %v402
        %434 = vmatpush1.msra.mxu0 %v401
        %435 = vmatprep.subr.mxu0 %v398
        %436 = vmatpush1.msra.mxu0 %v397
        %437 = vmatprep.subr.mxu0 %v394
        %438 = vmatpush1.msra.mxu0 %v393
        %439 = vmatprep.subr.mxu0 %v390
        %440 = vmatpush1.msra.mxu0 %v389
        %441 = vmatprep.subr.mxu0 0.0
        %442 = vmatpush2.msra.mxu0 0.0
        %443 = vmatprep.subr.mxu0 0.0
        %444 = vmatpush2.msra.mxu0 0.0
        %445 = vmatprep.subr.mxu0 0.0
        %446 = vmatpush2.msra.mxu0 0.0
        %447 = vmatprep.subr.mxu0 0.0
        %448 = vmatpush2.msra.mxu0 0.0
        %449 = vmatprep.subr.mxu0 0.0
        %450 = vmatpush2.msra.mxu0 0.0
        %451 = vmatprep.subr.mxu0 0.0
        %452 = vmatpush2.msra.mxu0 0.0
        %453 = vmatprep.subr.mxu0 0.0
        %454 = vmatpush2.msra.mxu0 0.0
        %455 = vmatprep.subr.mxu0 0.0
        %456 = vmatpush2.msra.mxu0 0.0
        %457 = vmatprep.subr.mxu0 0.0
        %458 = vmatpush2.msra.mxu0 0.0
        %459 = vmatprep.subr.mxu0 0.0
        %460 = vmatpush2.msra.mxu0 0.0
        %461 = vmatprep.subr.mxu0 0.0
        %462 = vmatpush2.msra.mxu0 0.0
        %463 = vmatprep.subr.mxu0 0.0
        %464 = vmatpush2.msra.mxu0 0.0
        %465 = vmatprep.subr.mxu0 0.0
        %466 = vmatpush2.msra.mxu0 0.0
        %467 = vmatprep.subr.mxu0 0.0
        %468 = vmatpush2.msra.mxu0 0.0
        %469 = vmatprep.subr.mxu0 0.0
        %470 = vmatpush2.msra.mxu0 0.0
        %471 = vmatprep.subr.mxu0 0.0
        %472 = vmatpush2.msra.mxu0 0.0
        %473 = vmatprep.mubr.f32.mxu0 0.0
        %474 = vmatmul.mubr.f32.gmra.mxu0 %v407
        %v475 = vpop.f32.mrf.mxu0
        %v476 = vadd.f32 0.0, %v475
        %v477 = vpop.f32.mrf.mxu0
        %v478 = vadd.f32 0.0, %v477
        %479 = vdwg.mxu0
        %480 = vmatprep.subr.mxu0 0.0
        %481 = vmatpush1.msra.mxu0 0.0
        %482 = vmatprep.subr.mxu0 0.0
        %483 = vmatpush1.msra.mxu0 0.0
        %484 = vmatprep.subr.mxu0 0.0
        %485 = vmatpush1.msra.mxu0 0.0
        %486 = vmatprep.subr.mxu0 0.0
        %487 = vmatpush1.msra.mxu0 0.0
        %488 = vmatprep.subr.mxu0 0.0
        %489 = vmatpush1.msra.mxu0 0.0
        %490 = vmatprep.subr.mxu0 0.0
        %491 = vmatpush1.msra.mxu0 0.0
        %492 = vmatprep.subr.mxu0 0.0
        %493 = vmatpush1.msra.mxu0 0.0
        %494 = vmatprep.subr.mxu0 0.0
        %495 = vmatpush1.msra.mxu0 0.0
        %496 = vmatprep.subr.mxu0 0.0
        %497 = vmatpush1.msra.mxu0 0.0
        %498 = vmatprep.subr.mxu0 0.0
        %499 = vmatpush1.msra.mxu0 0.0
        %500 = vmatprep.subr.mxu0 0.0
        %501 = vmatpush1.msra.mxu0 0.0
        %502 = vmatprep.subr.mxu0 0.0
        %503 = vmatpush1.msra.mxu0 0.0
        %504 = vmatprep.subr.mxu0 %v404
        %505 = vmatpush1.msra.mxu0 %v403
        %506 = vmatprep.subr.mxu0 %v400
        %507 = vmatpush1.msra.mxu0 %v399
        %508 = vmatprep.subr.mxu0 %v396
        %509 = vmatpush1.msra.mxu0 %v395
        %510 = vmatprep.subr.mxu0 %v392
        %511 = vmatpush1.msra.mxu0 %v391
        %512 = vmatprep.subr.mxu0 0.0
        %513 = vmatpush2.msra.mxu0 0.0
        %514 = vmatprep.subr.mxu0 0.0
        %515 = vmatpush2.msra.mxu0 0.0
        %516 = vmatprep.subr.mxu0 0.0
        %517 = vmatpush2.msra.mxu0 0.0
        %518 = vmatprep.subr.mxu0 0.0
        %519 = vmatpush2.msra.mxu0 0.0
        %520 = vmatprep.subr.mxu0 0.0
        %521 = vmatpush2.msra.mxu0 0.0
        %522 = vmatprep.subr.mxu0 0.0
        %523 = vmatpush2.msra.mxu0 0.0
        %524 = vmatprep.subr.mxu0 0.0
        %525 = vmatpush2.msra.mxu0 0.0
        %526 = vmatprep.subr.mxu0 0.0
        %527 = vmatpush2.msra.mxu0 0.0
        %528 = vmatprep.subr.mxu0 0.0
        %529 = vmatpush2.msra.mxu0 0.0
        %530 = vmatprep.subr.mxu0 0.0
        %531 = vmatpush2.msra.mxu0 0.0
        %532 = vmatprep.subr.mxu0 0.0
        %533 = vmatpush2.msra.mxu0 0.0
        %534 = vmatprep.subr.mxu0 0.0
        %535 = vmatpush2.msra.mxu0 0.0
        %536 = vmatprep.subr.mxu0 0.0
        %537 = vmatpush2.msra.mxu0 0.0
        %538 = vmatprep.subr.mxu0 0.0
        %539 = vmatpush2.msra.mxu0 0.0
        %540 = vmatprep.subr.mxu0 0.0
        %541 = vmatpush2.msra.mxu0 0.0
        %542 = vmatprep.subr.mxu0 0.0
        %543 = vmatpush2.msra.mxu0 0.0
        %544 = vmatprep.mubr.f32.mxu0 0.0
        %545 = vmatmul.mubr.f32.gmra.mxu0 %v407
        %v546 = vpop.f32.mrf.mxu0
        %v547 = vadd.f32 0.0, %v546
        %v548 = vpop.f32.mrf.mxu0
        %v549 = vadd.f32 0.0, %v548
        %550 = vdwg.mxu0
        %v551 = vld [vmem:[%s3] sm:$0x1]
        %v553 = vlaneseq
        %v554 = vshrl.u32 %v553, 7
        %v555 = vsub.s32 0, %v554
        %v556 = vrot.slane %v551, %v555
        %v558 = vadd.f32 %v549, %v556
        %v559 = vsub.f32 0.0, %v547
        %v560 = vmul.f32 %v559, 1.442695
        %v561 = vpow.pop %v560
        %v562 = vadd.f32 %v561, 1.0
        %v563 = vrcp.pop %v562
        %v564 = vmul.f32 1.0, %v563
        %vm565 = vcmask 31744
        %v566 = vsel %vm565, %v558, -inf
        %567 = vmax.xlane.f32.xlu0 %v566
        %v568 = vpop.xlane.xlu0 %567
        %v569 = vsub.f32 %v558, %v568
        %v570 = vmul.f32 %v569, 1.442695
        %v571 = vpow.pop %v570
        %v572 = vsel %vm565, %v571, 0.0
        %573 = vadd.xlane.f32.xlu0 %v572
        %v574 = vpop.xlane.xlu0 %573
        %v575 = vrcp.pop %v574
        %v576 = vmul.f32 %v571, %v575
        %v577 = vld [vmem:[%s339] sm:$0xf]
        %v578 = vld [vmem:[%s5] sm:$0xf]
        %v579 = vmul.f32 %v577, %v578
        %v580 = vmul.f32 %v478, %v476
        %582 = vset.pattern.permute.xlu0 0
        %583 = vperm.xlu0 %582, %v576
        %v584 = vpop.permute.xlu0 %583
        %v586 = vlaneseq
        %v587 = vshrl.u32 %v586, 7
        %v588 = vsub.s32 0, %v587
        %v589 = vrot.slane %v579, %v588
        %v590 = vmul.f32 %v584, %v589
        %v591 = vadd.f32 %v580, %v590
        %592 = vset.pattern.permute.xlu0 1
        %593 = vperm.xlu0 %592, %v576
        %v594 = vpop.permute.xlu0 %593
        %v596 = vlaneseq
        %v597 = vshrl.u32 %v596, 7
        %v598 = vsub.s32 1, %v597
        %v599 = vrot.slane %v579, %v598
        %v600 = vmul.f32 %v594, %v599
        %v601 = vadd.f32 %v591, %v600
        %602 = vset.pattern.permute.xlu0 2
        %603 = vperm.xlu0 %602, %v576
        %v604 = vpop.permute.xlu0 %603
        %v606 = vlaneseq
        %v607 = vshrl.u32 %v606, 7
        %v608 = vsub.s32 2, %v607
        %v609 = vrot.slane %v579, %v608
        %v610 = vmul.f32 %v604, %v609
        %v611 = vadd.f32 %v601, %v610
        %612 = vset.pattern.permute.xlu0 3
        %613 = vperm.xlu0 %612, %v576
        %v614 = vpop.permute.xlu0 %613
        %v616 = vlaneseq
        %v617 = vshrl.u32 %v616, 7
        %v618 = vsub.s32 3, %v617
        %v619 = vrot.slane %v579, %v618
        %v620 = vmul.f32 %v614, %v619
        %v621 = vadd.f32 %v611, %v620
        %v622 = vmul.f32 %v564, %v621
        %v623 = vld [vmem:[#allocation8] sm:$0xff]
        %v624 = vld [vmem:[#allocation8 + $0x8] sm:$0xff]
        %v625 = vld [vmem:[#allocation8 + $0x10] sm:$0xff]
        %v626 = vld [vmem:[#allocation8 + $0x18] sm:$0xff]
        %v628 = vsel %vm405, %v622, 0
        %630 = vmatprep.subr.mxu0 0.0
        %631 = vmatpush1.msra.mxu0 0.0
        %632 = vmatprep.subr.mxu0 0.0
        %633 = vmatpush1.msra.mxu0 0.0
        %634 = vmatprep.subr.mxu0 0.0
        %635 = vmatpush1.msra.mxu0 0.0
        %636 = vmatprep.subr.mxu0 0.0
        %637 = vmatpush1.msra.mxu0 0.0
        %638 = vmatprep.subr.mxu0 0.0
        %639 = vmatpush1.msra.mxu0 0.0
        %640 = vmatprep.subr.mxu0 0.0
        %641 = vmatpush1.msra.mxu0 0.0
        %642 = vmatprep.subr.mxu0 0.0
        %643 = vmatpush1.msra.mxu0 0.0
        %644 = vmatprep.subr.mxu0 0.0
        %645 = vmatpush1.msra.mxu0 0.0
        %646 = vmatprep.subr.mxu0 0.0
        %647 = vmatpush1.msra.mxu0 0.0
        %648 = vmatprep.subr.mxu0 0.0
        %649 = vmatpush1.msra.mxu0 0.0
        %650 = vmatprep.subr.mxu0 0.0
        %651 = vmatpush1.msra.mxu0 0.0
        %652 = vmatprep.subr.mxu0 0.0
        %653 = vmatpush1.msra.mxu0 0.0
        %654 = vmatprep.subr.mxu0 0.0
        %655 = vmatpush1.msra.mxu0 %v626
        %656 = vmatprep.subr.mxu0 0.0
        %657 = vmatpush1.msra.mxu0 %v625
        %658 = vmatprep.subr.mxu0 0.0
        %659 = vmatpush1.msra.mxu0 %v624
        %660 = vmatprep.subr.mxu0 0.0
        %661 = vmatpush1.msra.mxu0 %v623
        %662 = vmatprep.subr.mxu0 0.0
        %663 = vmatpush2.msra.mxu0 0.0
        %664 = vmatprep.subr.mxu0 0.0
        %665 = vmatpush2.msra.mxu0 0.0
        %666 = vmatprep.subr.mxu0 0.0
        %667 = vmatpush2.msra.mxu0 0.0
        %668 = vmatprep.subr.mxu0 0.0
        %669 = vmatpush2.msra.mxu0 0.0
        %670 = vmatprep.subr.mxu0 0.0
        %671 = vmatpush2.msra.mxu0 0.0
        %672 = vmatprep.subr.mxu0 0.0
        %673 = vmatpush2.msra.mxu0 0.0
        %674 = vmatprep.subr.mxu0 0.0
        %675 = vmatpush2.msra.mxu0 0.0
        %676 = vmatprep.subr.mxu0 0.0
        %677 = vmatpush2.msra.mxu0 0.0
        %678 = vmatprep.subr.mxu0 0.0
        %679 = vmatpush2.msra.mxu0 0.0
        %680 = vmatprep.subr.mxu0 0.0
        %681 = vmatpush2.msra.mxu0 0.0
        %682 = vmatprep.subr.mxu0 0.0
        %683 = vmatpush2.msra.mxu0 0.0
        %684 = vmatprep.subr.mxu0 0.0
        %685 = vmatpush2.msra.mxu0 0.0
        %686 = vmatprep.subr.mxu0 0.0
        %687 = vmatpush2.msra.mxu0 0.0
        %688 = vmatprep.subr.mxu0 0.0
        %689 = vmatpush2.msra.mxu0 0.0
        %690 = vmatprep.subr.mxu0 0.0
        %691 = vmatpush2.msra.mxu0 0.0
        %692 = vmatprep.subr.mxu0 0.0
        %693 = vmatpush2.msra.mxu0 0.0
        %694 = vmatprep.mubr.f32.mxu0 0.0
        %695 = vmatmul.mubr.f32.gmra.mxu0 %v628
        %v696 = vpop.f32.mrf.mxu0
        %v697 = vadd.f32 0.0, %v696
        %v698 = vpop.f32.mrf.mxu0
        %699 = vdwg.mxu0
        %700 = vst.msk [vmem:[%s380] sm:$0xff] %vm405, %v697
        %p701 = scmp.eq.s32.totalorder %s37, 0
        // Predicated region
        $region61: #{tpu_custom_call.1} parent=43 // pred_check
          %p702 = pneg %p701
        $region62: #{tpu_custom_call.1} parent=43 // pred_check_branch
          %704 = sbr.rel (%p702) target = $region64
        $region63: #{tpu_custom_call.1} parent=43 // pred_region
          %v705 = vlaneseq
          %v706 = vshrl.u32 %v705, 7
          %v707 = vsub.s32 7, %v706
          %v708 = vrot.slane %v580, %v707
          %v709 = vadd.f32 %v579, %v708
          %vm710 = vcmask 257024
          %711 = vst.msk [vmem:[%s387] sm:$0xf] %vm710, %v709
        $region64: #{tpu_custom_call.1} parent=43 // pred_fallthru
          _
        %s712 = sand.u32 %s192, 1
        %s713 = scalar_lea.sflag [#allocation4], %s712
        %s714 = sand.u32 %s192, 1
        %s715 = smul.addr %s714, 8
        %s716 = scalar_lea.vmem [#allocation10], %s715
        %s717 = sand.u32 %s218, 1
        %s718 = scalar_lea.sflag [#allocation12], %s717
        %s719 = sand.u32 %s218, 1
        %s720 = smul.addr %s719, 4
        %s721 = scalar_lea.vmem [#allocation11], %s720
        // Predicated region
        $region65: #{tpu_custom_call.1} parent=43 // pred_check
          %p722 = pneg %p202
        $region66: #{tpu_custom_call.1} parent=43 // pred_check_branch
          %724 = sbr.rel (%p722) target = $region68
        $region67: #{tpu_custom_call.1} parent=43 // pred_region
          %s726 = ssub.s32 128, 128
          %727 = vsyncadd %s713, %s726
          %s728 = sadd.s32 %s37, %s36
          %s729 = smul.addr %s728, 128
          %s730 = scalar_lea.hbm %s6, %s729
          %s732 = sshll.u32 %s716, 4
          %s733 = int_to_ptr.vmem [resolvable:$true] %s732
          %735 = dma.vmem_to_hbm [thread:$0]  %s733, 128, %s730, %s713
        $region68: #{tpu_custom_call.1} parent=43 // pred_fallthru
          _
        // Predicated region
        $region69: #{tpu_custom_call.1} parent=43 // pred_check
          %p736 = pneg %p228
        $region70: #{tpu_custom_call.1} parent=43 // pred_check_branch
          %738 = sbr.rel (%p736) target = $region72
        $region71: #{tpu_custom_call.1} parent=43 // pred_region
          %s740 = ssub.s32 64, 64
          %741 = vsyncadd %s718, %s740
          %s742 = smul.addr %s36, 64
          %s743 = scalar_lea.hbm %s7, %s742
          %s745 = sshll.u32 %s721, 4
          %s746 = int_to_ptr.vmem [resolvable:$true] %s745
          %748 = dma.vmem_to_hbm [thread:$0]  %s746, 64, %s743, %s718
        $region72: #{tpu_custom_call.1} parent=43 // pred_fallthru
          _
      $region44: #{tpu_custom_call.1} parent=5 // pred_fallthru
        _
      %p749 = scmp.le.s32.totalorder 2, %s27
      // Predicated region
      $region73: #{tpu_custom_call.1} parent=5 // pred_check
        %p750 = pneg %p749
      $region74: #{tpu_custom_call.1} parent=5 // pred_check_branch
        %752 = sbr.rel (%p750) target = $region76
      $region75: #{tpu_custom_call.1} parent=5 // pred_region
        %s753 = ssub.s32 %s27, 2
        // Predicated region
        $region77: #{tpu_custom_call.1} parent=75 // pred_check
          %p754 = pneg %p208
        $region78: #{tpu_custom_call.1} parent=75 // pred_check_branch
          %756 = sbr.rel (%p754) target = $region80
        $region79: #{tpu_custom_call.1} parent=75 // pred_region
          %s757 = sand.u32 %s193, 1
          %s758 = scalar_lea.sflag [#allocation4], %s757
          %s759 = sand.u32 %s193, 1
          %s760 = smul.addr %s759, 8
          %s761 = scalar_lea.vmem [#allocation10], %s760
          %762 = dma.done %s758, 128
        $region80: #{tpu_custom_call.1} parent=75 // pred_fallthru
          _
        // Predicated region
        $region81: #{tpu_custom_call.1} parent=75 // pred_check
          %p763 = pneg %p234
        $region82: #{tpu_custom_call.1} parent=75 // pred_check_branch
          %765 = sbr.rel (%p763) target = $region84
        $region83: #{tpu_custom_call.1} parent=75 // pred_region
          %s766 = sand.u32 %s219, 1
          %s767 = scalar_lea.sflag [#allocation12], %s766
          %s768 = sand.u32 %s219, 1
          %s769 = smul.addr %s768, 4
          %s770 = scalar_lea.vmem [#allocation11], %s769
          %771 = dma.done %s767, 64
        $region84: #{tpu_custom_call.1} parent=75 // pred_fallthru
          _
      $region76: #{tpu_custom_call.1} parent=5 // pred_fallthru
        _
    $region6: #{tpu_custom_call.1} parent=1 // loop_footer
      %s31 = sadd.s32 1, %s27
    $region7: #{tpu_custom_call.1} parent=1 // loop_footer_branch
      %26 = sbr.rel target = $region3
    $region8: #{tpu_custom_call.1} parent=1 // loop_exit
      _
    %772 = vsyncpa [#allocation3], 1
    %s773 = scalar_lea.sflag [#allocation3], 1
    %774 = vsyncpa %s773, 1
    %775 = vsyncpa [#allocation6], 1
    %s776 = scalar_lea.sflag [#allocation6], 1
    %777 = vsyncpa %s776, 1
    %778 = vsyncpa [#allocation9], 1
    %779 = vsyncpa [#allocation4], 1
    %s780 = scalar_lea.sflag [#allocation4], 1
    %781 = vsyncpa %s780, 1
    %782 = vsyncpa [#allocation12], 1
    %s783 = scalar_lea.sflag [#allocation12], 1
    %784 = vsyncpa %s783, 1

</llo_original>
